<compile_context>
chip_gen: v5e
topology: v5e:2x2
jax: 0.10.0
libtpu: 0.0.40
codegen_flags: <defaults>
</compile_context>

<pallas_src>
import jax
import jax.numpy as jnp
import numpy as np
from jax.experimental import pallas as pl
from jax.experimental.pallas import tpu as pltpu

# Small shapes consistent with the module structure.
BATCH = 8          # multiple of 8 -> fills vreg sublanes
SEQ = 8            # sequence_length
INPUT = 16         # input_size
HIDDEN = 32        # hidden_size
CLASSES = 10       # num_classes
CPAD = 128         # lane-padded FC output width
NUM_LAYERS = 2     # kernel hard-codes exactly 2 stacked layers


def rnn_kernel(x_ref,            # (S, TB, I)   time-major batch tile
               w0_ref,           # (I, H)       Wih0^T
               whh0_ref,         # (H, H)       Whh0^T
               b0_ref,           # (1, H)       bih0 + bhh0
               wih1_ref,         # (H, H)       Wih1^T
               whh1_ref,         # (H, H)       Whh1^T
               b1_ref,           # (1, H)       bih1 + bhh1
               fcw_ref,          # (S, H, CPAD) per-timestep fcW^T slices, lane-padded
               fcb_ref,          # (1, CPAD)
               out_ref,          # (TB, CPAD)
               xproj_ref,        # VMEM scratch (S*TB, H)
               h1s_ref):         # VMEM scratch (S, TB, H)
    S, TB, I = x_ref.shape
    H = whh0_ref.shape[0]

    # Hoisted layer-0 input projection: one MXU matmul for all timesteps.
    # (S, TB, I) -> (S*TB, I) is a layout-preserving leading-dim collapse.
    # Result goes to VMEM scratch (not vregs) so the unrolled loop stays
    # spill-free even at large batch tiles.
    x2d = x_ref[...].reshape(S * TB, I)
    xproj_ref[...] = (jnp.dot(x2d, w0_ref[...],
                              preferred_element_type=jnp.float32)
                      + b0_ref[...])

    whh0 = whh0_ref[...]
    wih1 = wih1_ref[...]
    whh1 = whh1_ref[...]
    b1 = b1_ref[...]                       # (1, H): cheap broadcast operand

    h0 = jnp.zeros((TB, H), jnp.float32)
    h1 = jnp.zeros((TB, H), jnp.float32)

    # Inherently sequential recurrence; statically unrolled (S is small).
    for t in range(S):
        # h1-recurrent matmul issued first: depends only on the previous h1,
        # so it overlaps the layer-0 matmul + tanh below.
        hh1 = jnp.dot(h1, whh1, preferred_element_type=jnp.float32)
        xp = xproj_ref[pl.ds(t * TB, TB), :]
        h0 = jnp.tanh(xp + jnp.dot(h0, whh0,
                                   preferred_element_type=jnp.float32))
        h1 = jnp.tanh(jnp.dot(h0, wih1, preferred_element_type=jnp.float32)
                      + hh1 + b1)
        h1s_ref[t] = h1                    # lane-aligned slab store

    # Deferred FC (off the recurrence critical path):
    #   out = sum_t h1_t @ fcW^T[t*H:(t+1)*H, :] + fcb
    # S independent MXU matmuls, lane-dense (TB, 128) output tile.
    acc = (jnp.dot(h1s_ref[0], fcw_ref[0], preferred_element_type=jnp.float32)
           + fcb_ref[...])
    for t in range(1, S):
        acc = acc + jnp.dot(h1s_ref[t], fcw_ref[t],
                            preferred_element_type=jnp.float32)
    out_ref[...] = acc


def _pick_batch_tile(B):
    """>=2 tiles when B >= 16 (v7x megacore), multiple of 8, capped at 256."""
    if B < 16:
        return B
    tb = min(256, B // 2)
    tb -= tb % 8
    while tb >= 8 and B % tb != 0:
        tb -= 8
    return tb if tb >= 8 else B


def rnn_forward(x, params, *, batch_tile=None):
    """x: (B, S, I) float32.  params: dict of PyTorch-convention weights."""
    B, S, I = x.shape
    H, C = HIDDEN, CLASSES
    TB = _pick_batch_tile(B) if batch_tile is None else batch_tile
    assert B % TB == 0, "batch must be divisible by the batch tile"
    assert TB == B or TB % 8 == 0, "batch tile must be a multiple of 8 (or == B)"

    # Wrapper-side (one-time, off the serial path) weight prep.
    xt = jnp.transpose(x, (1, 0, 2))                                 # (S, B, I)
    w0 = params["wih0"].T                                            # (I, H)
    whh0 = params["whh0"].T                                          # (H, H)
    b0 = (params["bih0"] + params["bhh0"]).reshape(1, H)
    wih1 = params["wih1"].T                                          # (H, H)
    whh1 = params["whh1"].T                                          # (H, H)
    b1 = (params["bih1"] + params["bhh1"]).reshape(1, H)
    # FC: lane-pad the output dim to 128 and split per-timestep -> (S, H, CPAD).
    fcw_t = params["fcw"].T                                          # (S*H, C)
    fcw_pad = jnp.zeros((S * H, CPAD), jnp.float32).at[:, :C].set(fcw_t)
    fcw3 = fcw_pad.reshape(S, H, CPAD)
    fcb_pad = jnp.zeros((1, CPAD), jnp.float32).at[:, :C].set(
        params["fcb"].reshape(1, C))

    def full(*shape):
        return pl.BlockSpec(shape, lambda i: (0,) * len(shape))

    grid_spec = pltpu.PrefetchScalarGridSpec(
        num_scalar_prefetch=0,
        grid=(B // TB,),
        in_specs=[
            pl.BlockSpec((S, TB, I), lambda i: (0, i, 0)),   # batch-tiled x
            full(I, H), full(H, H), full(1, H),              # layer 0
            full(H, H), full(H, H), full(1, H),              # layer 1
            full(S, H, CPAD), full(1, CPAD),                 # FC (padded)
        ],
        out_specs=pl.BlockSpec((TB, CPAD), lambda i: (i, 0)),
        scratch_shapes=[
            pltpu.VMEM((S * TB, H), jnp.float32),            # xproj
            pltpu.VMEM((S, TB, H), jnp.float32),             # per-step h1
        ],
    )

    out_pad = pl.pallas_call(
        rnn_kernel,
        out_shape=jax.ShapeDtypeStruct((B, CPAD), jnp.float32),
        grid_spec=grid_spec,
        compiler_params=pltpu.CompilerParams(
            dimension_semantics=("parallel",)),   # shards batch tiles on v7x
    )(xt, w0, whh0, b0, wih1, whh1, b1, fcw3, fcb_pad)

    return out_pad[:, :C]


def rnn_reference(x, p):
    """Pure-JAX reference mirroring nn.RNN(batch_first=True) + nn.Linear."""
    B, S, _ = x.shape
    h0 = jnp.zeros((B, HIDDEN), jnp.float32)
    h1 = jnp.zeros((B, HIDDEN), jnp.float32)
    outs = []
    for t in range(S):
        xt = x[:, t, :]
        h0 = jnp.tanh(xt @ p["wih0"].T + p["bih0"] + h0 @ p["whh0"].T + p["bhh0"])
        h1 = jnp.tanh(h0 @ p["wih1"].T + p["bih1"] + h1 @ p["whh1"].T + p["bhh1"])
        outs.append(h1)
    out = jnp.stack(outs, axis=1).reshape(B, -1)       # (B, S*H)
    return out @ p["fcw"].T + p["fcb"]


def init_params(key):
    """Deterministic init with PyTorch-style uniform(-1/sqrt(H), 1/sqrt(H))."""
    k = 1.0 / np.sqrt(HIDDEN)
    keys = jax.random.split(key, 10)
    u = lambda kk, shape: jax.random.uniform(kk, shape, jnp.float32, -k, k)
    return {
        "wih0": u(keys[0], (HIDDEN, INPUT)),
        "whh0": u(keys[1], (HIDDEN, HIDDEN)),
        "bih0": u(keys[2], (HIDDEN,)),
        "bhh0": u(keys[3], (HIDDEN,)),
        "wih1": u(keys[4], (HIDDEN, HIDDEN)),
        "whh1": u(keys[5], (HIDDEN, HIDDEN)),
        "bih1": u(keys[6], (HIDDEN,)),
        "bhh1": u(keys[7], (HIDDEN,)),
        "fcw":  u(keys[8], (CLASSES, HIDDEN * SEQ)),
        "fcb":  u(keys[9], (CLASSES,)),
    }


if __name__ == "__main__":
    key = jax.random.PRNGKey(0)
    pkey, xkey = jax.random.split(key)
    params = init_params(pkey)
    x = jax.random.normal(xkey, (BATCH, SEQ, INPUT), jnp.float32)

    logits = rnn_forward(x, params)
    jax.block_until_ready(logits)

    ref = rnn_reference(x, params)
    np.testing.assert_allclose(np.asarray(logits), np.asarray(ref),
                               rtol=1e-5, atol=1e-5)
    print("KERNEL_OK")
</pallas_src>

<mosaic_0001>
module attributes {stable_mosaic.version = 11 : i64} {
  func.func @rnn_kernel(%arg0: i32, %arg1: memref<8x8x16xf32, #tpu.memory_space<vmem>>, %arg2: memref<16x32xf32, #tpu.memory_space<vmem>>, %arg3: memref<32x32xf32, #tpu.memory_space<vmem>>, %arg4: memref<1x32xf32, #tpu.memory_space<vmem>>, %arg5: memref<32x32xf32, #tpu.memory_space<vmem>>, %arg6: memref<32x32xf32, #tpu.memory_space<vmem>>, %arg7: memref<1x32xf32, #tpu.memory_space<vmem>>, %arg8: memref<8x32x128xf32, #tpu.memory_space<vmem>>, %arg9: memref<1x128xf32, #tpu.memory_space<vmem>>, %arg10: memref<8x128xf32, #tpu.memory_space<vmem>>, %arg11: memref<64x32xf32, #tpu.memory_space<vmem>>, %arg12: memref<8x8x32xf32, #tpu.memory_space<vmem>>) attributes {dimension_semantics = [#tpu.dimension_semantics<parallel>], iteration_bounds = array<i64: 1>, scalar_prefetch = 0 : i64, scratch_operands = 2 : i64, tpu.core_type = #tpu.core_type<tc>, window_params = [{transform_indices = @transform_0, window_bounds = array<i64: 8, 8, 16>}, {pipeline_mode = #tpu.pipeline_mode<synchronous>, transform_indices = @transform_1, window_bounds = array<i64: 16, 32>}, {pipeline_mode = #tpu.pipeline_mode<synchronous>, transform_indices = @transform_2, window_bounds = array<i64: 32, 32>}, {pipeline_mode = #tpu.pipeline_mode<synchronous>, transform_indices = @transform_3, window_bounds = array<i64: 1, 32>}, {pipeline_mode = #tpu.pipeline_mode<synchronous>, transform_indices = @transform_4, window_bounds = array<i64: 32, 32>}, {pipeline_mode = #tpu.pipeline_mode<synchronous>, transform_indices = @transform_5, window_bounds = array<i64: 32, 32>}, {pipeline_mode = #tpu.pipeline_mode<synchronous>, transform_indices = @transform_6, window_bounds = array<i64: 1, 32>}, {pipeline_mode = #tpu.pipeline_mode<synchronous>, transform_indices = @transform_7, window_bounds = array<i64: 8, 32, 128>}, {pipeline_mode = #tpu.pipeline_mode<synchronous>, transform_indices = @transform_8, window_bounds = array<i64: 1, 128>}, {transform_indices = @transform_9, window_bounds = array<i64: 8, 128>}]} {
    %c0 = arith.constant 0 : index
    %c0_0 = arith.constant 0 : index
    %c0_1 = arith.constant 0 : index
    %0 = vector.load %arg1[%c0, %c0_0, %c0_1] : memref<8x8x16xf32, #tpu.memory_space<vmem>>, vector<8x8x16xf32>
    %1 = vector.shape_cast %0 : vector<8x8x16xf32> to vector<64x16xf32>
    %c0_2 = arith.constant 0 : index
    %c0_3 = arith.constant 0 : index
    %2 = vector.load %arg2[%c0_2, %c0_3] : memref<16x32xf32, #tpu.memory_space<vmem>>, vector<16x32xf32>
    %cst = arith.constant dense<0.000000e+00> : vector<64x32xf32>
    %3 = tpu.matmul %1, %2, %cst {dimension_numbers = #tpu.dot_dimension_numbers<[1], [0], [0], [1], [0, 0, 1, 1], [], []>} : vector<64x16xf32>, vector<16x32xf32>, vector<64x32xf32> -> vector<64x32xf32>
    %c0_4 = arith.constant 0 : index
    %c0_5 = arith.constant 0 : index
    %4 = vector.load %arg4[%c0_4, %c0_5] : memref<1x32xf32, #tpu.memory_space<vmem>>, vector<1x32xf32>
    %5 = vector.broadcast %4 : vector<1x32xf32> to vector<64x32xf32>
    %6 = arith.addf %3, %5 : vector<64x32xf32>
    %c0_6 = arith.constant 0 : index
    %c0_7 = arith.constant 0 : index
    %7 = vector.load %arg11[%c0_6, %c0_7] : memref<64x32xf32, #tpu.memory_space<vmem>>, vector<64x32xf32>
    tpu.vector_store %arg11[%c0_6, %c0_7], %6 {strides = array<i32>} : memref<64x32xf32, #tpu.memory_space<vmem>>, vector<64x32xf32>,
    %c0_8 = arith.constant 0 : index
    %c0_9 = arith.constant 0 : index
    %8 = vector.load %arg3[%c0_8, %c0_9] : memref<32x32xf32, #tpu.memory_space<vmem>>, vector<32x32xf32>
    %c0_10 = arith.constant 0 : index
    %c0_11 = arith.constant 0 : index
    %9 = vector.load %arg5[%c0_10, %c0_11] : memref<32x32xf32, #tpu.memory_space<vmem>>, vector<32x32xf32>
    %c0_12 = arith.constant 0 : index
    %c0_13 = arith.constant 0 : index
    %10 = vector.load %arg6[%c0_12, %c0_13] : memref<32x32xf32, #tpu.memory_space<vmem>>, vector<32x32xf32>
    %c0_14 = arith.constant 0 : index
    %c0_15 = arith.constant 0 : index
    %11 = vector.load %arg7[%c0_14, %c0_15] : memref<1x32xf32, #tpu.memory_space<vmem>>, vector<1x32xf32>
    %cst_16 = arith.constant 0.000000e+00 : f32
    %12 = vector.broadcast %cst_16 : f32 to vector<8x32xf32>
    %cst_17 = arith.constant 0.000000e+00 : f32
    %13 = vector.broadcast %cst_17 : f32 to vector<8x32xf32>
    %cst_18 = arith.constant dense<0.000000e+00> : vector<8x32xf32>
    %14 = tpu.matmul %13, %10, %cst_18 {dimension_numbers = #tpu.dot_dimension_numbers<[1], [0], [0], [1], [0, 0, 1, 1], [], []>} : vector<8x32xf32>, vector<32x32xf32>, vector<8x32xf32> -> vector<8x32xf32>
    %c0_19 = arith.constant 0 : index
    %c0_20 = arith.constant 0 : index
    %15 = vector.load %arg11[%c0_19, %c0_20] : memref<64x32xf32, #tpu.memory_space<vmem>>, vector<8x32xf32>
    %cst_21 = arith.constant dense<0.000000e+00> : vector<8x32xf32>
    %16 = tpu.matmul %12, %8, %cst_21 {dimension_numbers = #tpu.dot_dimension_numbers<[1], [0], [0], [1], [0, 0, 1, 1], [], []>} : vector<8x32xf32>, vector<32x32xf32>, vector<8x32xf32> -> vector<8x32xf32>
    %17 = arith.addf %15, %16 : vector<8x32xf32>
    %18 = math.tanh %17 : vector<8x32xf32>
    %cst_22 = arith.constant dense<0.000000e+00> : vector<8x32xf32>
    %19 = tpu.matmul %18, %9, %cst_22 {dimension_numbers = #tpu.dot_dimension_numbers<[1], [0], [0], [1], [0, 0, 1, 1], [], []>} : vector<8x32xf32>, vector<32x32xf32>, vector<8x32xf32> -> vector<8x32xf32>
    %20 = arith.addf %19, %14 : vector<8x32xf32>
    %21 = vector.broadcast %11 : vector<1x32xf32> to vector<8x32xf32>
    %22 = arith.addf %20, %21 : vector<8x32xf32>
    %23 = math.tanh %22 : vector<8x32xf32>
    %c0_23 = arith.constant 0 : index
    %c0_24 = arith.constant 0 : index
    %c0_25 = arith.constant 0 : index
    %24 = vector.load %arg12[%c0_23, %c0_24, %c0_25] : memref<8x8x32xf32, #tpu.memory_space<vmem>>, vector<1x8x32xf32>
    %25 = vector.shape_cast %24 : vector<1x8x32xf32> to vector<8x32xf32>
    %26 = vector.shape_cast %23 : vector<8x32xf32> to vector<1x8x32xf32>
    tpu.vector_store %arg12[%c0_23, %c0_24, %c0_25], %26 {strides = array<i32>} : memref<8x8x32xf32, #tpu.memory_space<vmem>>, vector<1x8x32xf32>,
    %cst_26 = arith.constant dense<0.000000e+00> : vector<8x32xf32>
    %27 = tpu.matmul %23, %10, %cst_26 {dimension_numbers = #tpu.dot_dimension_numbers<[1], [0], [0], [1], [0, 0, 1, 1], [], []>} : vector<8x32xf32>, vector<32x32xf32>, vector<8x32xf32> -> vector<8x32xf32>
    %c8 = arith.constant 8 : index
    %c0_27 = arith.constant 0 : index
    %28 = vector.load %arg11[%c8, %c0_27] : memref<64x32xf32, #tpu.memory_space<vmem>>, vector<8x32xf32>
    %cst_28 = arith.constant dense<0.000000e+00> : vector<8x32xf32>
    %29 = tpu.matmul %18, %8, %cst_28 {dimension_numbers = #tpu.dot_dimension_numbers<[1], [0], [0], [1], [0, 0, 1, 1], [], []>} : vector<8x32xf32>, vector<32x32xf32>, vector<8x32xf32> -> vector<8x32xf32>
    %30 = arith.addf %28, %29 : vector<8x32xf32>
    %31 = math.tanh %30 : vector<8x32xf32>
    %cst_29 = arith.constant dense<0.000000e+00> : vector<8x32xf32>
    %32 = tpu.matmul %31, %9, %cst_29 {dimension_numbers = #tpu.dot_dimension_numbers<[1], [0], [0], [1], [0, 0, 1, 1], [], []>} : vector<8x32xf32>, vector<32x32xf32>, vector<8x32xf32> -> vector<8x32xf32>
    %33 = arith.addf %32, %27 : vector<8x32xf32>
    %34 = vector.broadcast %11 : vector<1x32xf32> to vector<8x32xf32>
    %35 = arith.addf %33, %34 : vector<8x32xf32>
    %36 = math.tanh %35 : vector<8x32xf32>
    %c1 = arith.constant 1 : index
    %c0_30 = arith.constant 0 : index
    %c0_31 = arith.constant 0 : index
    %37 = vector.load %arg12[%c1, %c0_30, %c0_31] : memref<8x8x32xf32, #tpu.memory_space<vmem>>, vector<1x8x32xf32>
    %38 = vector.shape_cast %37 : vector<1x8x32xf32> to vector<8x32xf32>
    %39 = vector.shape_cast %36 : vector<8x32xf32> to vector<1x8x32xf32>
    tpu.vector_store %arg12[%c1, %c0_30, %c0_31], %39 {strides = array<i32>} : memref<8x8x32xf32, #tpu.memory_space<vmem>>, vector<1x8x32xf32>,
    %cst_32 = arith.constant dense<0.000000e+00> : vector<8x32xf32>
    %40 = tpu.matmul %36, %10, %cst_32 {dimension_numbers = #tpu.dot_dimension_numbers<[1], [0], [0], [1], [0, 0, 1, 1], [], []>} : vector<8x32xf32>, vector<32x32xf32>, vector<8x32xf32> -> vector<8x32xf32>
    %c16 = arith.constant 16 : index
    %c0_33 = arith.constant 0 : index
    %41 = vector.load %arg11[%c16, %c0_33] : memref<64x32xf32, #tpu.memory_space<vmem>>, vector<8x32xf32>
    %cst_34 = arith.constant dense<0.000000e+00> : vector<8x32xf32>
    %42 = tpu.matmul %31, %8, %cst_34 {dimension_numbers = #tpu.dot_dimension_numbers<[1], [0], [0], [1], [0, 0, 1, 1], [], []>} : vector<8x32xf32>, vector<32x32xf32>, vector<8x32xf32> -> vector<8x32xf32>
    %43 = arith.addf %41, %42 : vector<8x32xf32>
    %44 = math.tanh %43 : vector<8x32xf32>
    %cst_35 = arith.constant dense<0.000000e+00> : vector<8x32xf32>
    %45 = tpu.matmul %44, %9, %cst_35 {dimension_numbers = #tpu.dot_dimension_numbers<[1], [0], [0], [1], [0, 0, 1, 1], [], []>} : vector<8x32xf32>, vector<32x32xf32>, vector<8x32xf32> -> vector<8x32xf32>
    %46 = arith.addf %45, %40 : vector<8x32xf32>
    %47 = vector.broadcast %11 : vector<1x32xf32> to vector<8x32xf32>
    %48 = arith.addf %46, %47 : vector<8x32xf32>
    %49 = math.tanh %48 : vector<8x32xf32>
    %c2 = arith.constant 2 : index
    %c0_36 = arith.constant 0 : index
    %c0_37 = arith.constant 0 : index
    %50 = vector.load %arg12[%c2, %c0_36, %c0_37] : memref<8x8x32xf32, #tpu.memory_space<vmem>>, vector<1x8x32xf32>
    %51 = vector.shape_cast %50 : vector<1x8x32xf32> to vector<8x32xf32>
    %52 = vector.shape_cast %49 : vector<8x32xf32> to vector<1x8x32xf32>
    tpu.vector_store %arg12[%c2, %c0_36, %c0_37], %52 {strides = array<i32>} : memref<8x8x32xf32, #tpu.memory_space<vmem>>, vector<1x8x32xf32>,
    %cst_38 = arith.constant dense<0.000000e+00> : vector<8x32xf32>
    %53 = tpu.matmul %49, %10, %cst_38 {dimension_numbers = #tpu.dot_dimension_numbers<[1], [0], [0], [1], [0, 0, 1, 1], [], []>} : vector<8x32xf32>, vector<32x32xf32>, vector<8x32xf32> -> vector<8x32xf32>
    %c24 = arith.constant 24 : index
    %c0_39 = arith.constant 0 : index
    %54 = vector.load %arg11[%c24, %c0_39] : memref<64x32xf32, #tpu.memory_space<vmem>>, vector<8x32xf32>
    %cst_40 = arith.constant dense<0.000000e+00> : vector<8x32xf32>
    %55 = tpu.matmul %44, %8, %cst_40 {dimension_numbers = #tpu.dot_dimension_numbers<[1], [0], [0], [1], [0, 0, 1, 1], [], []>} : vector<8x32xf32>, vector<32x32xf32>, vector<8x32xf32> -> vector<8x32xf32>
    %56 = arith.addf %54, %55 : vector<8x32xf32>
    %57 = math.tanh %56 : vector<8x32xf32>
    %cst_41 = arith.constant dense<0.000000e+00> : vector<8x32xf32>
    %58 = tpu.matmul %57, %9, %cst_41 {dimension_numbers = #tpu.dot_dimension_numbers<[1], [0], [0], [1], [0, 0, 1, 1], [], []>} : vector<8x32xf32>, vector<32x32xf32>, vector<8x32xf32> -> vector<8x32xf32>
    %59 = arith.addf %58, %53 : vector<8x32xf32>
    %60 = vector.broadcast %11 : vector<1x32xf32> to vector<8x32xf32>
    %61 = arith.addf %59, %60 : vector<8x32xf32>
    %62 = math.tanh %61 : vector<8x32xf32>
    %c3 = arith.constant 3 : index
    %c0_42 = arith.constant 0 : index
    %c0_43 = arith.constant 0 : index
    %63 = vector.load %arg12[%c3, %c0_42, %c0_43] : memref<8x8x32xf32, #tpu.memory_space<vmem>>, vector<1x8x32xf32>
    %64 = vector.shape_cast %63 : vector<1x8x32xf32> to vector<8x32xf32>
    %65 = vector.shape_cast %62 : vector<8x32xf32> to vector<1x8x32xf32>
    tpu.vector_store %arg12[%c3, %c0_42, %c0_43], %65 {strides = array<i32>} : memref<8x8x32xf32, #tpu.memory_space<vmem>>, vector<1x8x32xf32>,
    %cst_44 = arith.constant dense<0.000000e+00> : vector<8x32xf32>
    %66 = tpu.matmul %62, %10, %cst_44 {dimension_numbers = #tpu.dot_dimension_numbers<[1], [0], [0], [1], [0, 0, 1, 1], [], []>} : vector<8x32xf32>, vector<32x32xf32>, vector<8x32xf32> -> vector<8x32xf32>
    %c32 = arith.constant 32 : index
    %c0_45 = arith.constant 0 : index
    %67 = vector.load %arg11[%c32, %c0_45] : memref<64x32xf32, #tpu.memory_space<vmem>>, vector<8x32xf32>
    %cst_46 = arith.constant dense<0.000000e+00> : vector<8x32xf32>
    %68 = tpu.matmul %57, %8, %cst_46 {dimension_numbers = #tpu.dot_dimension_numbers<[1], [0], [0], [1], [0, 0, 1, 1], [], []>} : vector<8x32xf32>, vector<32x32xf32>, vector<8x32xf32> -> vector<8x32xf32>
    %69 = arith.addf %67, %68 : vector<8x32xf32>
    %70 = math.tanh %69 : vector<8x32xf32>
    %cst_47 = arith.constant dense<0.000000e+00> : vector<8x32xf32>
    %71 = tpu.matmul %70, %9, %cst_47 {dimension_numbers = #tpu.dot_dimension_numbers<[1], [0], [0], [1], [0, 0, 1, 1], [], []>} : vector<8x32xf32>, vector<32x32xf32>, vector<8x32xf32> -> vector<8x32xf32>
    %72 = arith.addf %71, %66 : vector<8x32xf32>
    %73 = vector.broadcast %11 : vector<1x32xf32> to vector<8x32xf32>
    %74 = arith.addf %72, %73 : vector<8x32xf32>
    %75 = math.tanh %74 : vector<8x32xf32>
    %c4 = arith.constant 4 : index
    %c0_48 = arith.constant 0 : index
    %c0_49 = arith.constant 0 : index
    %76 = vector.load %arg12[%c4, %c0_48, %c0_49] : memref<8x8x32xf32, #tpu.memory_space<vmem>>, vector<1x8x32xf32>
    %77 = vector.shape_cast %76 : vector<1x8x32xf32> to vector<8x32xf32>
    %78 = vector.shape_cast %75 : vector<8x32xf32> to vector<1x8x32xf32>
    tpu.vector_store %arg12[%c4, %c0_48, %c0_49], %78 {strides = array<i32>} : memref<8x8x32xf32, #tpu.memory_space<vmem>>, vector<1x8x32xf32>,
    %cst_50 = arith.constant dense<0.000000e+00> : vector<8x32xf32>
    %79 = tpu.matmul %75, %10, %cst_50 {dimension_numbers = #tpu.dot_dimension_numbers<[1], [0], [0], [1], [0, 0, 1, 1], [], []>} : vector<8x32xf32>, vector<32x32xf32>, vector<8x32xf32> -> vector<8x32xf32>
    %c40 = arith.constant 40 : index
    %c0_51 = arith.constant 0 : index
    %80 = vector.load %arg11[%c40, %c0_51] : memref<64x32xf32, #tpu.memory_space<vmem>>, vector<8x32xf32>
    %cst_52 = arith.constant dense<0.000000e+00> : vector<8x32xf32>
    %81 = tpu.matmul %70, %8, %cst_52 {dimension_numbers = #tpu.dot_dimension_numbers<[1], [0], [0], [1], [0, 0, 1, 1], [], []>} : vector<8x32xf32>, vector<32x32xf32>, vector<8x32xf32> -> vector<8x32xf32>
    %82 = arith.addf %80, %81 : vector<8x32xf32>
    %83 = math.tanh %82 : vector<8x32xf32>
    %cst_53 = arith.constant dense<0.000000e+00> : vector<8x32xf32>
    %84 = tpu.matmul %83, %9, %cst_53 {dimension_numbers = #tpu.dot_dimension_numbers<[1], [0], [0], [1], [0, 0, 1, 1], [], []>} : vector<8x32xf32>, vector<32x32xf32>, vector<8x32xf32> -> vector<8x32xf32>
    %85 = arith.addf %84, %79 : vector<8x32xf32>
    %86 = vector.broadcast %11 : vector<1x32xf32> to vector<8x32xf32>
    %87 = arith.addf %85, %86 : vector<8x32xf32>
    %88 = math.tanh %87 : vector<8x32xf32>
    %c5 = arith.constant 5 : index
    %c0_54 = arith.constant 0 : index
    %c0_55 = arith.constant 0 : index
    %89 = vector.load %arg12[%c5, %c0_54, %c0_55] : memref<8x8x32xf32, #tpu.memory_space<vmem>>, vector<1x8x32xf32>
    %90 = vector.shape_cast %89 : vector<1x8x32xf32> to vector<8x32xf32>
    %91 = vector.shape_cast %88 : vector<8x32xf32> to vector<1x8x32xf32>
    tpu.vector_store %arg12[%c5, %c0_54, %c0_55], %91 {strides = array<i32>} : memref<8x8x32xf32, #tpu.memory_space<vmem>>, vector<1x8x32xf32>,
    %cst_56 = arith.constant dense<0.000000e+00> : vector<8x32xf32>
    %92 = tpu.matmul %88, %10, %cst_56 {dimension_numbers = #tpu.dot_dimension_numbers<[1], [0], [0], [1], [0, 0, 1, 1], [], []>} : vector<8x32xf32>, vector<32x32xf32>, vector<8x32xf32> -> vector<8x32xf32>
    %c48 = arith.constant 48 : index
    %c0_57 = arith.constant 0 : index
    %93 = vector.load %arg11[%c48, %c0_57] : memref<64x32xf32, #tpu.memory_space<vmem>>, vector<8x32xf32>
    %cst_58 = arith.constant dense<0.000000e+00> : vector<8x32xf32>
    %94 = tpu.matmul %83, %8, %cst_58 {dimension_numbers = #tpu.dot_dimension_numbers<[1], [0], [0], [1], [0, 0, 1, 1], [], []>} : vector<8x32xf32>, vector<32x32xf32>, vector<8x32xf32> -> vector<8x32xf32>
    %95 = arith.addf %93, %94 : vector<8x32xf32>
    %96 = math.tanh %95 : vector<8x32xf32>
    %cst_59 = arith.constant dense<0.000000e+00> : vector<8x32xf32>
    %97 = tpu.matmul %96, %9, %cst_59 {dimension_numbers = #tpu.dot_dimension_numbers<[1], [0], [0], [1], [0, 0, 1, 1], [], []>} : vector<8x32xf32>, vector<32x32xf32>, vector<8x32xf32> -> vector<8x32xf32>
    %98 = arith.addf %97, %92 : vector<8x32xf32>
    %99 = vector.broadcast %11 : vector<1x32xf32> to vector<8x32xf32>
    %100 = arith.addf %98, %99 : vector<8x32xf32>
    %101 = math.tanh %100 : vector<8x32xf32>
    %c6 = arith.constant 6 : index
    %c0_60 = arith.constant 0 : index
    %c0_61 = arith.constant 0 : index
    %102 = vector.load %arg12[%c6, %c0_60, %c0_61] : memref<8x8x32xf32, #tpu.memory_space<vmem>>, vector<1x8x32xf32>
    %103 = vector.shape_cast %102 : vector<1x8x32xf32> to vector<8x32xf32>
    %104 = vector.shape_cast %101 : vector<8x32xf32> to vector<1x8x32xf32>
    tpu.vector_store %arg12[%c6, %c0_60, %c0_61], %104 {strides = array<i32>} : memref<8x8x32xf32, #tpu.memory_space<vmem>>, vector<1x8x32xf32>,
    %cst_62 = arith.constant dense<0.000000e+00> : vector<8x32xf32>
    %105 = tpu.matmul %101, %10, %cst_62 {dimension_numbers = #tpu.dot_dimension_numbers<[1], [0], [0], [1], [0, 0, 1, 1], [], []>} : vector<8x32xf32>, vector<32x32xf32>, vector<8x32xf32> -> vector<8x32xf32>
    %c56 = arith.constant 56 : index
    %c0_63 = arith.constant 0 : index
    %106 = vector.load %arg11[%c56, %c0_63] : memref<64x32xf32, #tpu.memory_space<vmem>>, vector<8x32xf32>
    %cst_64 = arith.constant dense<0.000000e+00> : vector<8x32xf32>
    %107 = tpu.matmul %96, %8, %cst_64 {dimension_numbers = #tpu.dot_dimension_numbers<[1], [0], [0], [1], [0, 0, 1, 1], [], []>} : vector<8x32xf32>, vector<32x32xf32>, vector<8x32xf32> -> vector<8x32xf32>
    %108 = arith.addf %106, %107 : vector<8x32xf32>
    %109 = math.tanh %108 : vector<8x32xf32>
    %cst_65 = arith.constant dense<0.000000e+00> : vector<8x32xf32>
    %110 = tpu.matmul %109, %9, %cst_65 {dimension_numbers = #tpu.dot_dimension_numbers<[1], [0], [0], [1], [0, 0, 1, 1], [], []>} : vector<8x32xf32>, vector<32x32xf32>, vector<8x32xf32> -> vector<8x32xf32>
    %111 = arith.addf %110, %105 : vector<8x32xf32>
    %112 = vector.broadcast %11 : vector<1x32xf32> to vector<8x32xf32>
    %113 = arith.addf %111, %112 : vector<8x32xf32>
    %114 = math.tanh %113 : vector<8x32xf32>
    %c7 = arith.constant 7 : index
    %c0_66 = arith.constant 0 : index
    %c0_67 = arith.constant 0 : index
    %115 = vector.load %arg12[%c7, %c0_66, %c0_67] : memref<8x8x32xf32, #tpu.memory_space<vmem>>, vector<1x8x32xf32>
    %116 = vector.shape_cast %115 : vector<1x8x32xf32> to vector<8x32xf32>
    %117 = vector.shape_cast %114 : vector<8x32xf32> to vector<1x8x32xf32>
    tpu.vector_store %arg12[%c7, %c0_66, %c0_67], %117 {strides = array<i32>} : memref<8x8x32xf32, #tpu.memory_space<vmem>>, vector<1x8x32xf32>,
    %c0_68 = arith.constant 0 : index
    %c0_69 = arith.constant 0 : index
    %c0_70 = arith.constant 0 : index
    %118 = vector.load %arg12[%c0_68, %c0_69, %c0_70] : memref<8x8x32xf32, #tpu.memory_space<vmem>>, vector<1x8x32xf32>
    %119 = vector.shape_cast %118 : vector<1x8x32xf32> to vector<8x32xf32>
    %c0_71 = arith.constant 0 : index
    %c0_72 = arith.constant 0 : index
    %c0_73 = arith.constant 0 : index
    %120 = vector.load %arg8[%c0_71, %c0_72, %c0_73] : memref<8x32x128xf32, #tpu.memory_space<vmem>>, vector<1x32x128xf32>
    %121 = vector.shape_cast %120 : vector<1x32x128xf32> to vector<32x128xf32>
    %cst_74 = arith.constant dense<0.000000e+00> : vector<8x128xf32>
    %122 = tpu.matmul %119, %121, %cst_74 {dimension_numbers = #tpu.dot_dimension_numbers<[1], [0], [0], [1], [0, 0, 1, 1], [], []>} : vector<8x32xf32>, vector<32x128xf32>, vector<8x128xf32> -> vector<8x128xf32>
    %c0_75 = arith.constant 0 : index
    %c0_76 = arith.constant 0 : index
    %123 = vector.load %arg9[%c0_75, %c0_76] : memref<1x128xf32, #tpu.memory_space<vmem>>, vector<1x128xf32>
    %124 = vector.broadcast %123 : vector<1x128xf32> to vector<8x128xf32>
    %125 = arith.addf %122, %124 : vector<8x128xf32>
    %c1_77 = arith.constant 1 : index
    %c0_78 = arith.constant 0 : index
    %c0_79 = arith.constant 0 : index
    %126 = vector.load %arg12[%c1_77, %c0_78, %c0_79] : memref<8x8x32xf32, #tpu.memory_space<vmem>>, vector<1x8x32xf32>
    %127 = vector.shape_cast %126 : vector<1x8x32xf32> to vector<8x32xf32>
    %c1_80 = arith.constant 1 : index
    %c0_81 = arith.constant 0 : index
    %c0_82 = arith.constant 0 : index
    %128 = vector.load %arg8[%c1_80, %c0_81, %c0_82] : memref<8x32x128xf32, #tpu.memory_space<vmem>>, vector<1x32x128xf32>
    %129 = vector.shape_cast %128 : vector<1x32x128xf32> to vector<32x128xf32>
    %cst_83 = arith.constant dense<0.000000e+00> : vector<8x128xf32>
    %130 = tpu.matmul %127, %129, %cst_83 {dimension_numbers = #tpu.dot_dimension_numbers<[1], [0], [0], [1], [0, 0, 1, 1], [], []>} : vector<8x32xf32>, vector<32x128xf32>, vector<8x128xf32> -> vector<8x128xf32>
    %131 = arith.addf %125, %130 : vector<8x128xf32>
    %c2_84 = arith.constant 2 : index
    %c0_85 = arith.constant 0 : index
    %c0_86 = arith.constant 0 : index
    %132 = vector.load %arg12[%c2_84, %c0_85, %c0_86] : memref<8x8x32xf32, #tpu.memory_space<vmem>>, vector<1x8x32xf32>
    %133 = vector.shape_cast %132 : vector<1x8x32xf32> to vector<8x32xf32>
    %c2_87 = arith.constant 2 : index
    %c0_88 = arith.constant 0 : index
    %c0_89 = arith.constant 0 : index
    %134 = vector.load %arg8[%c2_87, %c0_88, %c0_89] : memref<8x32x128xf32, #tpu.memory_space<vmem>>, vector<1x32x128xf32>
    %135 = vector.shape_cast %134 : vector<1x32x128xf32> to vector<32x128xf32>
    %cst_90 = arith.constant dense<0.000000e+00> : vector<8x128xf32>
    %136 = tpu.matmul %133, %135, %cst_90 {dimension_numbers = #tpu.dot_dimension_numbers<[1], [0], [0], [1], [0, 0, 1, 1], [], []>} : vector<8x32xf32>, vector<32x128xf32>, vector<8x128xf32> -> vector<8x128xf32>
    %137 = arith.addf %131, %136 : vector<8x128xf32>
    %c3_91 = arith.constant 3 : index
    %c0_92 = arith.constant 0 : index
    %c0_93 = arith.constant 0 : index
    %138 = vector.load %arg12[%c3_91, %c0_92, %c0_93] : memref<8x8x32xf32, #tpu.memory_space<vmem>>, vector<1x8x32xf32>
    %139 = vector.shape_cast %138 : vector<1x8x32xf32> to vector<8x32xf32>
    %c3_94 = arith.constant 3 : index
    %c0_95 = arith.constant 0 : index
    %c0_96 = arith.constant 0 : index
    %140 = vector.load %arg8[%c3_94, %c0_95, %c0_96] : memref<8x32x128xf32, #tpu.memory_space<vmem>>, vector<1x32x128xf32>
    %141 = vector.shape_cast %140 : vector<1x32x128xf32> to vector<32x128xf32>
    %cst_97 = arith.constant dense<0.000000e+00> : vector<8x128xf32>
    %142 = tpu.matmul %139, %141, %cst_97 {dimension_numbers = #tpu.dot_dimension_numbers<[1], [0], [0], [1], [0, 0, 1, 1], [], []>} : vector<8x32xf32>, vector<32x128xf32>, vector<8x128xf32> -> vector<8x128xf32>
    %143 = arith.addf %137, %142 : vector<8x128xf32>
    %c4_98 = arith.constant 4 : index
    %c0_99 = arith.constant 0 : index
    %c0_100 = arith.constant 0 : index
    %144 = vector.load %arg12[%c4_98, %c0_99, %c0_100] : memref<8x8x32xf32, #tpu.memory_space<vmem>>, vector<1x8x32xf32>
    %145 = vector.shape_cast %144 : vector<1x8x32xf32> to vector<8x32xf32>
    %c4_101 = arith.constant 4 : index
    %c0_102 = arith.constant 0 : index
    %c0_103 = arith.constant 0 : index
    %146 = vector.load %arg8[%c4_101, %c0_102, %c0_103] : memref<8x32x128xf32, #tpu.memory_space<vmem>>, vector<1x32x128xf32>
    %147 = vector.shape_cast %146 : vector<1x32x128xf32> to vector<32x128xf32>
    %cst_104 = arith.constant dense<0.000000e+00> : vector<8x128xf32>
    %148 = tpu.matmul %145, %147, %cst_104 {dimension_numbers = #tpu.dot_dimension_numbers<[1], [0], [0], [1], [0, 0, 1, 1], [], []>} : vector<8x32xf32>, vector<32x128xf32>, vector<8x128xf32> -> vector<8x128xf32>
    %149 = arith.addf %143, %148 : vector<8x128xf32>
    %c5_105 = arith.constant 5 : index
    %c0_106 = arith.constant 0 : index
    %c0_107 = arith.constant 0 : index
    %150 = vector.load %arg12[%c5_105, %c0_106, %c0_107] : memref<8x8x32xf32, #tpu.memory_space<vmem>>, vector<1x8x32xf32>
    %151 = vector.shape_cast %150 : vector<1x8x32xf32> to vector<8x32xf32>
    %c5_108 = arith.constant 5 : index
    %c0_109 = arith.constant 0 : index
    %c0_110 = arith.constant 0 : index
    %152 = vector.load %arg8[%c5_108, %c0_109, %c0_110] : memref<8x32x128xf32, #tpu.memory_space<vmem>>, vector<1x32x128xf32>
    %153 = vector.shape_cast %152 : vector<1x32x128xf32> to vector<32x128xf32>
    %cst_111 = arith.constant dense<0.000000e+00> : vector<8x128xf32>
    %154 = tpu.matmul %151, %153, %cst_111 {dimension_numbers = #tpu.dot_dimension_numbers<[1], [0], [0], [1], [0, 0, 1, 1], [], []>} : vector<8x32xf32>, vector<32x128xf32>, vector<8x128xf32> -> vector<8x128xf32>
    %155 = arith.addf %149, %154 : vector<8x128xf32>
    %c6_112 = arith.constant 6 : index
    %c0_113 = arith.constant 0 : index
    %c0_114 = arith.constant 0 : index
    %156 = vector.load %arg12[%c6_112, %c0_113, %c0_114] : memref<8x8x32xf32, #tpu.memory_space<vmem>>, vector<1x8x32xf32>
    %157 = vector.shape_cast %156 : vector<1x8x32xf32> to vector<8x32xf32>
    %c6_115 = arith.constant 6 : index
    %c0_116 = arith.constant 0 : index
    %c0_117 = arith.constant 0 : index
    %158 = vector.load %arg8[%c6_115, %c0_116, %c0_117] : memref<8x32x128xf32, #tpu.memory_space<vmem>>, vector<1x32x128xf32>
    %159 = vector.shape_cast %158 : vector<1x32x128xf32> to vector<32x128xf32>
    %cst_118 = arith.constant dense<0.000000e+00> : vector<8x128xf32>
    %160 = tpu.matmul %157, %159, %cst_118 {dimension_numbers = #tpu.dot_dimension_numbers<[1], [0], [0], [1], [0, 0, 1, 1], [], []>} : vector<8x32xf32>, vector<32x128xf32>, vector<8x128xf32> -> vector<8x128xf32>
    %161 = arith.addf %155, %160 : vector<8x128xf32>
    %c7_119 = arith.constant 7 : index
    %c0_120 = arith.constant 0 : index
    %c0_121 = arith.constant 0 : index
    %162 = vector.load %arg12[%c7_119, %c0_120, %c0_121] : memref<8x8x32xf32, #tpu.memory_space<vmem>>, vector<1x8x32xf32>
    %163 = vector.shape_cast %162 : vector<1x8x32xf32> to vector<8x32xf32>
    %c7_122 = arith.constant 7 : index
    %c0_123 = arith.constant 0 : index
    %c0_124 = arith.constant 0 : index
    %164 = vector.load %arg8[%c7_122, %c0_123, %c0_124] : memref<8x32x128xf32, #tpu.memory_space<vmem>>, vector<1x32x128xf32>
    %165 = vector.shape_cast %164 : vector<1x32x128xf32> to vector<32x128xf32>
    %cst_125 = arith.constant dense<0.000000e+00> : vector<8x128xf32>
    %166 = tpu.matmul %163, %165, %cst_125 {dimension_numbers = #tpu.dot_dimension_numbers<[1], [0], [0], [1], [0, 0, 1, 1], [], []>} : vector<8x32xf32>, vector<32x128xf32>, vector<8x128xf32> -> vector<8x128xf32>
    %167 = arith.addf %161, %166 : vector<8x128xf32>
    %c0_126 = arith.constant 0 : index
    %c0_127 = arith.constant 0 : index
    %168 = vector.load %arg10[%c0_126, %c0_127] : memref<8x128xf32, #tpu.memory_space<vmem>>, vector<8x128xf32>
    tpu.vector_store %arg10[%c0_126, %c0_127], %167 {strides = array<i32>} : memref<8x128xf32, #tpu.memory_space<vmem>>, vector<8x128xf32>,
    return
  }
  func.func @transform_0(%arg0: i32) -> (i32, i32, i32) {
    %c0_i32 = arith.constant 0 : i32
    %c0_i32_0 = arith.constant 0 : i32
    %c0_i32_1 = arith.constant 0 : i32
    return %c0_i32, %arg0, %c0_i32_0 : i32, i32, i32
  }
  func.func @transform_1(%arg0: i32) -> (i32, i32) {
    %c0_i32 = arith.constant 0 : i32
    %c0_i32_0 = arith.constant 0 : i32
    %c0_i32_1 = arith.constant 0 : i32
    return %c0_i32, %c0_i32_0 : i32, i32
  }
  func.func @transform_2(%arg0: i32) -> (i32, i32) {
    %c0_i32 = arith.constant 0 : i32
    %c0_i32_0 = arith.constant 0 : i32
    %c0_i32_1 = arith.constant 0 : i32
    return %c0_i32, %c0_i32_0 : i32, i32
  }
  func.func @transform_3(%arg0: i32) -> (i32, i32) {
    %c0_i32 = arith.constant 0 : i32
    %c0_i32_0 = arith.constant 0 : i32
    %c0_i32_1 = arith.constant 0 : i32
    return %c0_i32, %c0_i32_0 : i32, i32
  }
  func.func @transform_4(%arg0: i32) -> (i32, i32) {
    %c0_i32 = arith.constant 0 : i32
    %c0_i32_0 = arith.constant 0 : i32
    %c0_i32_1 = arith.constant 0 : i32
    return %c0_i32, %c0_i32_0 : i32, i32
  }
  func.func @transform_5(%arg0: i32) -> (i32, i32) {
    %c0_i32 = arith.constant 0 : i32
    %c0_i32_0 = arith.constant 0 : i32
    %c0_i32_1 = arith.constant 0 : i32
    return %c0_i32, %c0_i32_0 : i32, i32
  }
  func.func @transform_6(%arg0: i32) -> (i32, i32) {
    %c0_i32 = arith.constant 0 : i32
    %c0_i32_0 = arith.constant 0 : i32
    %c0_i32_1 = arith.constant 0 : i32
    return %c0_i32, %c0_i32_0 : i32, i32
  }
  func.func @transform_7(%arg0: i32) -> (i32, i32, i32) {
    %c0_i32 = arith.constant 0 : i32
    %c0_i32_0 = arith.constant 0 : i32
    %c0_i32_1 = arith.constant 0 : i32
    %c0_i32_2 = arith.constant 0 : i32
    return %c0_i32, %c0_i32_0, %c0_i32_1 : i32, i32, i32
  }
  func.func @transform_8(%arg0: i32) -> (i32, i32) {
    %c0_i32 = arith.constant 0 : i32
    %c0_i32_0 = arith.constant 0 : i32
    %c0_i32_1 = arith.constant 0 : i32
    return %c0_i32, %c0_i32_0 : i32, i32
  }
  func.func @transform_9(%arg0: i32) -> (i32, i32) {
    %c0_i32 = arith.constant 0 : i32
    %c0_i32_0 = arith.constant 0 : i32
    return %arg0, %c0_i32 : i32, i32
  }
}

</mosaic_0001>

<llo_original>
// kernel: tpu_custom_call.1
$region0: #{tpu_custom_call.1}
  #allocation0 [shape = 'u32[]', space=smem, size = 0x4, offset = 0x4, fixed_abs, tag = 'smem constant byte address 0x4 - core index']
  #allocation1 [shape = 'u32[72,128]{1,0:T(1,128)}', space=vmem, size = 0x9000, scoped, tag = 'internal scratch']
  #allocation2 [shape = 'f32[64,32]{1,0:T(8,128)}', space=vmem, size = 0x8000, scoped, tag = 'scratch operand']
  #allocation3 [shape = 'f32[8,8,32]{2,1,0:T(8,128)}', space=vmem, size = 0x8000, scoped, tag = 'scratch operand']
  %s0 = inlined_call_operand.hbm [shape: f32[8,8,16], index: 0, kind: input, shape index: {}]
  %s1 = inlined_call_operand.hbm [shape: f32[16,32], index: 1, kind: input, shape index: {}]
  %s2 = inlined_call_operand.hbm [shape: f32[32,32], index: 2, kind: input, shape index: {}]
  %s3 = inlined_call_operand.vmem [shape: f32[1,32], index: 3, kind: input, shape index: {}]
  %s4 = inlined_call_operand.hbm [shape: f32[32,32], index: 4, kind: input, shape index: {}]
  %s5 = inlined_call_operand.hbm [shape: f32[32,32], index: 5, kind: input, shape index: {}]
  %s6 = inlined_call_operand.vmem [shape: f32[1,32], index: 6, kind: input, shape index: {}]
  %s7 = inlined_call_operand.hbm [shape: f32[8,32,128], index: 7, kind: input, shape index: {}]
  %s8 = inlined_call_operand.vmem [shape: f32[1,128], index: 8, kind: input, shape index: {}]
  %s9 = inlined_call_operand.hbm [shape: f32[8,128], index: 9, kind: output, shape index: {}]
  %s10 = sld [smem:[#allocation0]]
  $region70: #{tpu_custom_call.1} parent=0
    _
  %s12 = ssub.s32 1, %s10
  %s13 = scalar_select 0, %s12, %s10
  $region1: #{tpu_custom_call.1} parent=0
    #allocation4 [shape = 'u8[32768]{0}', space=vmem, size = 0x8000, scoped, tag = 'input window, operand 0, single buffered']
    #allocation5 [shape = 's32[1]{0}', space=sflag, size = 0x4, scoped, tag = 'scoped memory for tpu_custom_call.1']
    #allocation6 [shape = 's32[1]{0}', space=sflag, size = 0x4, scoped, tag = 'scoped memory for tpu_custom_call.1']
    #allocation7 [shape = 'u8[8192]{0}', space=vmem, size = 0x2000, scoped, tag = 'input window, operand 1, single buffered']
    #allocation8 [shape = 's32[1]{0}', space=sflag, size = 0x4, scoped, tag = 'scoped memory for tpu_custom_call.1']
    #allocation9 [shape = 'u8[16384]{0}', space=vmem, size = 0x4000, scoped, tag = 'input window, operand 2, single buffered']
    #allocation10 [shape = 'u8[16384]{0}', space=vmem, size = 0x4000, scoped, tag = 'input window, operand 4, single buffered']
    #allocation11 [shape = 's32[1]{0}', space=sflag, size = 0x4, scoped, tag = 'scoped memory for tpu_custom_call.1']
    #allocation12 [shape = 'u8[16384]{0}', space=vmem, size = 0x4000, scoped, tag = 'input window, operand 5, single buffered']
    #allocation13 [shape = 'u8[131072]{0}', space=vmem, size = 0x20000, scoped, tag = 'input window, operand 7, single buffered']
    #allocation14 [shape = 's32[1]{0}', space=sflag, size = 0x4, scoped, tag = 'scoped memory for tpu_custom_call.1']
    #allocation15 [shape = 'u8[4096]{0}', space=vmem, size = 0x1000, scoped, tag = 'output window, operand 0, single buffered']
    %14 = vsyncpa [#allocation5], 0
    %15 = vsyncpa [#allocation8], 0
    %16 = vsyncpa [#allocation11], 0
    %17 = vsyncpa [#allocation14], 0
    %18 = vsyncpa [#allocation6], 0
    // Predicated region
    $region2: #{tpu_custom_call.1} parent=1 // pred_check
      _
    $region3: #{tpu_custom_call.1} parent=1 // pred_check_branch
      %20 = sbr.rel (0) target = $region5
    $region4: #{tpu_custom_call.1} parent=1 // pred_region
      %22 = vsyncadd [#allocation5], 0
      %s23 = sshll.u32 %s0, 4
      %s24 = int_to_ptr.hbm [resolvable:$true] %s23
      %s25 = sshll.u32 [#allocation4], 4
      %s26 = int_to_ptr.vmem [resolvable:$true] %s25
      %31 = dma.hbm_to_vmem [thread:$0]  %s24, 1024, %s26, [#allocation5], 128, 128, 8
    $region5: #{tpu_custom_call.1} parent=1 // pred_fallthru
      _
    // Predicated region
    $region6: #{tpu_custom_call.1} parent=1 // pred_check
      _
    $region7: #{tpu_custom_call.1} parent=1 // pred_check_branch
      %33 = sbr.rel (0) target = $region9
    $region8: #{tpu_custom_call.1} parent=1 // pred_region
      %35 = vsyncadd [#allocation8], 0
      %s36 = sshll.u32 %s1, 4
      %s37 = int_to_ptr.hbm [resolvable:$true] %s36
      %s38 = sshll.u32 [#allocation7], 4
      %s39 = int_to_ptr.vmem [resolvable:$true] %s38
      %44 = dma.hbm_to_vmem [thread:$0]  %s37, 256, %s39, [#allocation8], 128, 128, 8
    $region9: #{tpu_custom_call.1} parent=1 // pred_fallthru
      _
    // Predicated region
    $region10: #{tpu_custom_call.1} parent=1 // pred_check
      _
    $region11: #{tpu_custom_call.1} parent=1 // pred_check_branch
      %46 = sbr.rel (0) target = $region13
    $region12: #{tpu_custom_call.1} parent=1 // pred_region
      %48 = vsyncadd [#allocation8], 0
      %s49 = sshll.u32 %s2, 4
      %s50 = int_to_ptr.hbm [resolvable:$true] %s49
      %s51 = sshll.u32 [#allocation9], 4
      %s52 = int_to_ptr.vmem [resolvable:$true] %s51
      %57 = dma.hbm_to_vmem [thread:$0]  %s50, 512, %s52, [#allocation8], 128, 128, 8
    $region13: #{tpu_custom_call.1} parent=1 // pred_fallthru
      _
    // Predicated region
    $region14: #{tpu_custom_call.1} parent=1 // pred_check
      _
    $region15: #{tpu_custom_call.1} parent=1 // pred_check_branch
      %59 = sbr.rel (0) target = $region17
    $region16: #{tpu_custom_call.1} parent=1 // pred_region
      _
    $region17: #{tpu_custom_call.1} parent=1 // pred_fallthru
      _
    // Predicated region
    $region18: #{tpu_custom_call.1} parent=1 // pred_check
      _
    $region19: #{tpu_custom_call.1} parent=1 // pred_check_branch
      %61 = sbr.rel (0) target = $region21
    $region20: #{tpu_custom_call.1} parent=1 // pred_region
      %63 = vsyncadd [#allocation11], 0
      %s64 = sshll.u32 %s4, 4
      %s65 = int_to_ptr.hbm [resolvable:$true] %s64
      %s66 = sshll.u32 [#allocation10], 4
      %s67 = int_to_ptr.vmem [resolvable:$true] %s66
      %72 = dma.hbm_to_vmem [thread:$0]  %s65, 512, %s67, [#allocation11], 128, 128, 8
    $region21: #{tpu_custom_call.1} parent=1 // pred_fallthru
      _
    // Predicated region
    $region22: #{tpu_custom_call.1} parent=1 // pred_check
      _
    $region23: #{tpu_custom_call.1} parent=1 // pred_check_branch
      %74 = sbr.rel (0) target = $region25
    $region24: #{tpu_custom_call.1} parent=1 // pred_region
      %76 = vsyncadd [#allocation11], 0
      %s77 = sshll.u32 %s5, 4
      %s78 = int_to_ptr.hbm [resolvable:$true] %s77
      %s79 = sshll.u32 [#allocation12], 4
      %s80 = int_to_ptr.vmem [resolvable:$true] %s79
      %85 = dma.hbm_to_vmem [thread:$0]  %s78, 512, %s80, [#allocation11], 128, 128, 8
    $region25: #{tpu_custom_call.1} parent=1 // pred_fallthru
      _
    // Predicated region
    $region26: #{tpu_custom_call.1} parent=1 // pred_check
      _
    $region27: #{tpu_custom_call.1} parent=1 // pred_check_branch
      %87 = sbr.rel (0) target = $region29
    $region28: #{tpu_custom_call.1} parent=1 // pred_region
      _
    $region29: #{tpu_custom_call.1} parent=1 // pred_fallthru
      _
    // Predicated region
    $region30: #{tpu_custom_call.1} parent=1 // pred_check
      _
    $region31: #{tpu_custom_call.1} parent=1 // pred_check_branch
      %89 = sbr.rel (0) target = $region33
    $region32: #{tpu_custom_call.1} parent=1 // pred_region
      %91 = vsyncadd [#allocation14], 0
      %s92 = sshll.u32 %s7, 4
      %s93 = int_to_ptr.hbm [resolvable:$true] %s92
      %s94 = sshll.u32 [#allocation13], 4
      %s95 = int_to_ptr.vmem [resolvable:$true] %s94
      %100 = dma.hbm_to_vmem [thread:$0]  %s93, 4096, %s95, [#allocation14], 128, 128, 8
    $region33: #{tpu_custom_call.1} parent=1 // pred_fallthru
      _
    // Predicated region
    $region34: #{tpu_custom_call.1} parent=1 // pred_check
      _
    $region35: #{tpu_custom_call.1} parent=1 // pred_check_branch
      %102 = sbr.rel (0) target = $region37
    $region36: #{tpu_custom_call.1} parent=1 // pred_region
      _
    $region37: #{tpu_custom_call.1} parent=1 // pred_fallthru
      _
    // Predicated region
    $region38: #{tpu_custom_call.1} parent=1 // pred_check
      _
    $region39: #{tpu_custom_call.1} parent=1 // pred_check_branch
      %104 = sbr.rel (0) target = $region41
    $region40: #{tpu_custom_call.1} parent=1 // pred_region
      %106 = dma.done [#allocation5], 1024
    $region41: #{tpu_custom_call.1} parent=1 // pred_fallthru
      _
    // Predicated region
    $region42: #{tpu_custom_call.1} parent=1 // pred_check
      _
    $region43: #{tpu_custom_call.1} parent=1 // pred_check_branch
      %108 = sbr.rel (0) target = $region45
    $region44: #{tpu_custom_call.1} parent=1 // pred_region
      %110 = dma.done [#allocation8], 256
    $region45: #{tpu_custom_call.1} parent=1 // pred_fallthru
      _
    // Predicated region
    $region46: #{tpu_custom_call.1} parent=1 // pred_check
      _
    $region47: #{tpu_custom_call.1} parent=1 // pred_check_branch
      %112 = sbr.rel (0) target = $region49
    $region48: #{tpu_custom_call.1} parent=1 // pred_region
      %114 = dma.done [#allocation8], 512
    $region49: #{tpu_custom_call.1} parent=1 // pred_fallthru
      _
    // Predicated region
    $region50: #{tpu_custom_call.1} parent=1 // pred_check
      _
    $region51: #{tpu_custom_call.1} parent=1 // pred_check_branch
      %116 = sbr.rel (0) target = $region53
    $region52: #{tpu_custom_call.1} parent=1 // pred_region
      %118 = dma.done [#allocation11], 512
    $region53: #{tpu_custom_call.1} parent=1 // pred_fallthru
      _
    // Predicated region
    $region54: #{tpu_custom_call.1} parent=1 // pred_check
      _
    $region55: #{tpu_custom_call.1} parent=1 // pred_check_branch
      %120 = sbr.rel (0) target = $region57
    $region56: #{tpu_custom_call.1} parent=1 // pred_region
      %122 = dma.done [#allocation11], 512
    $region57: #{tpu_custom_call.1} parent=1 // pred_fallthru
      _
    // Predicated region
    $region58: #{tpu_custom_call.1} parent=1 // pred_check
      _
    $region59: #{tpu_custom_call.1} parent=1 // pred_check_branch
      %124 = sbr.rel (0) target = $region61
    $region60: #{tpu_custom_call.1} parent=1 // pred_region
      %126 = dma.done [#allocation14], 4096
    $region61: #{tpu_custom_call.1} parent=1 // pred_fallthru
      _
    %v127 = vld [vmem:[#allocation4] sm:$0xff]
    %v128 = vld [vmem:[#allocation4 + $0x8] sm:$0xff]
    %v129 = vld [vmem:[#allocation4 + $0x10] sm:$0xff]
    %v130 = vld [vmem:[#allocation4 + $0x18] sm:$0xff]
    %v131 = vld [vmem:[#allocation4 + $0x20] sm:$0xff]
    %v132 = vld [vmem:[#allocation4 + $0x28] sm:$0xff]
    %v133 = vld [vmem:[#allocation4 + $0x30] sm:$0xff]
    %v134 = vld [vmem:[#allocation4 + $0x38] sm:$0xff]
    %v135 = vld [vmem:[#allocation7] sm:$0xff]
    %v136 = vld [vmem:[#allocation7 + $0x8] sm:$0xff]
    %v137 = vld [vmem:[%s3] sm:$0x1]
    %v139 = vperm.slane %v137, 0
    %vm141 = vcmask 130048
    %v143 = vsel %vm141, %v127, 0
    %v146 = vsel %vm141, %v128, 0
    %v149 = vsel %vm141, %v129, 0
    %v152 = vsel %vm141, %v130, 0
    %v155 = vsel %vm141, %v131, 0
    %v158 = vsel %vm141, %v132, 0
    %v161 = vsel %vm141, %v133, 0
    %v164 = vsel %vm141, %v134, 0
    %166 = vmatpush.msra.mxu0 0.0
    %167 = vmatpush.msra.mxu0 0.0
    %168 = vmatpush.msra.mxu0 0.0
    %169 = vmatpush.msra.mxu0 0.0
    %170 = vmatpush.msra.mxu0 0.0
    %171 = vmatpush.msra.mxu0 0.0
    %172 = vmatpush.msra.mxu0 0.0
    %173 = vmatpush.msra.mxu0 0.0
    %174 = vmatpush.msra.mxu0 0.0
    %175 = vmatpush.msra.mxu0 0.0
    %176 = vmatpush.msra.mxu0 0.0
    %177 = vmatpush.msra.mxu0 0.0
    %178 = vmatpush.msra.mxu0 0.0
    %179 = vmatpush.msra.mxu0 0.0
    %180 = vmatpush.msra.mxu0 %v136
    %181 = vmatpush.msra.mxu0 %v135
    %182 = vmatmul.f32.gmra.mxu0 %v143
    %v183 = vpop.f32.mrf.mxu0
    %v184 = vadd.f32 %v139, %v183
    %185 = vmatmul.f32.gmra.mxu0 %v146
    %v186 = vpop.f32.mrf.mxu0
    %v187 = vadd.f32 %v139, %v186
    %188 = vmatmul.f32.gmra.mxu0 %v149
    %v189 = vpop.f32.mrf.mxu0
    %v190 = vadd.f32 %v139, %v189
    %191 = vmatmul.f32.gmra.mxu0 %v152
    %v192 = vpop.f32.mrf.mxu0
    %v193 = vadd.f32 %v139, %v192
    %194 = vmatmul.f32.gmra.mxu0 %v155
    %v195 = vpop.f32.mrf.mxu0
    %v196 = vadd.f32 %v139, %v195
    %197 = vmatmul.f32.gmra.mxu0 %v158
    %v198 = vpop.f32.mrf.mxu0
    %v199 = vadd.f32 %v139, %v198
    %200 = vmatmul.f32.gmra.mxu0 %v161
    %v201 = vpop.f32.mrf.mxu0
    %v202 = vadd.f32 %v139, %v201
    %203 = vmatmul.f32.gmra.mxu0 %v164
    %v204 = vpop.f32.mrf.mxu0
    %v205 = vadd.f32 %v139, %v204
    %206 = vdwg.mxu0
    %vm207 = vcmask 261120
    %208 = vst.msk [vmem:[#allocation2] sm:$0xff] %vm207, %v184
    %209 = vst.msk [vmem:[#allocation2 + $0x8] sm:$0xff] %vm207, %v187
    %210 = vst.msk [vmem:[#allocation2 + $0x10] sm:$0xff] %vm207, %v190
    %211 = vst.msk [vmem:[#allocation2 + $0x18] sm:$0xff] %vm207, %v193
    %212 = vst.msk [vmem:[#allocation2 + $0x20] sm:$0xff] %vm207, %v196
    %213 = vst.msk [vmem:[#allocation2 + $0x28] sm:$0xff] %vm207, %v199
    %214 = vst.msk [vmem:[#allocation2 + $0x30] sm:$0xff] %vm207, %v202
    %215 = vst.msk [vmem:[#allocation2 + $0x38] sm:$0xff] %vm207, %v205
    %v216 = vld [vmem:[#allocation9] sm:$0xff]
    %v217 = vld [vmem:[#allocation9 + $0x8] sm:$0xff]
    %v218 = vld [vmem:[#allocation9 + $0x10] sm:$0xff]
    %v219 = vld [vmem:[#allocation9 + $0x18] sm:$0xff]
    %v220 = vld [vmem:[#allocation10] sm:$0xff]
    %v221 = vld [vmem:[#allocation10 + $0x8] sm:$0xff]
    %v222 = vld [vmem:[#allocation10 + $0x10] sm:$0xff]
    %v223 = vld [vmem:[#allocation10 + $0x18] sm:$0xff]
    %v224 = vld [vmem:[#allocation12] sm:$0xff]
    %v225 = vld [vmem:[#allocation12 + $0x8] sm:$0xff]
    %v226 = vld [vmem:[#allocation12 + $0x10] sm:$0xff]
    %v227 = vld [vmem:[#allocation12 + $0x18] sm:$0xff]
    %v228 = vld [vmem:[%s6] sm:$0x1]
    %v230 = vsel %vm207, 0.0, 0
    %232 = vmatpush.msra.mxu0 0.0
    %233 = vmatpush.msra.mxu0 0.0
    %234 = vmatpush.msra.mxu0 0.0
    %235 = vmatpush.msra.mxu0 0.0
    %236 = vmatpush.msra.mxu0 0.0
    %237 = vmatpush.msra.mxu0 0.0
    %238 = vmatpush.msra.mxu0 0.0
    %239 = vmatpush.msra.mxu0 0.0
    %240 = vmatpush.msra.mxu0 0.0
    %241 = vmatpush.msra.mxu0 0.0
    %242 = vmatpush.msra.mxu0 0.0
    %243 = vmatpush.msra.mxu0 0.0
    %244 = vmatpush.msra.mxu0 %v227
    %245 = vmatpush.msra.mxu0 %v226
    %246 = vmatpush.msra.mxu0 %v225
    %247 = vmatpush.msra.mxu0 %v224
    %248 = vmatmul.f32.gmra.mxu0 %v230
    %v249 = vpop.f32.mrf.mxu0
    %v250 = vadd.f32 0.0, %v249
    %251 = vdwg.mxu0
    %v252 = vld [vmem:[#allocation2] sm:$0xff]
    %253 = vmatpush.msra.mxu0 0.0
    %254 = vmatpush.msra.mxu0 0.0
    %255 = vmatpush.msra.mxu0 0.0
    %256 = vmatpush.msra.mxu0 0.0
    %257 = vmatpush.msra.mxu0 0.0
    %258 = vmatpush.msra.mxu0 0.0
    %259 = vmatpush.msra.mxu0 0.0
    %260 = vmatpush.msra.mxu0 0.0
    %261 = vmatpush.msra.mxu0 0.0
    %262 = vmatpush.msra.mxu0 0.0
    %263 = vmatpush.msra.mxu0 0.0
    %264 = vmatpush.msra.mxu0 0.0
    %265 = vmatpush.msra.mxu0 %v219
    %266 = vmatpush.msra.mxu0 %v218
    %267 = vmatpush.msra.mxu0 %v217
    %268 = vmatpush.msra.mxu0 %v216
    %269 = vmatmul.f32.gmra.mxu0 %v230
    %v270 = vpop.f32.mrf.mxu0
    %v271 = vadd.f32 0.0, %v270
    %272 = vdwg.mxu0
    %v273 = vadd.f32 %v252, %v271
    %v274 = vtanh.pop %v273
    %v276 = vsel %vm207, %v274, 0
    %278 = vmatpush.msra.mxu0 0.0
    %279 = vmatpush.msra.mxu0 0.0
    %280 = vmatpush.msra.mxu0 0.0
    %281 = vmatpush.msra.mxu0 0.0
    %282 = vmatpush.msra.mxu0 0.0
    %283 = vmatpush.msra.mxu0 0.0
    %284 = vmatpush.msra.mxu0 0.0
    %285 = vmatpush.msra.mxu0 0.0
    %286 = vmatpush.msra.mxu0 0.0
    %287 = vmatpush.msra.mxu0 0.0
    %288 = vmatpush.msra.mxu0 0.0
    %289 = vmatpush.msra.mxu0 0.0
    %290 = vmatpush.msra.mxu0 %v223
    %291 = vmatpush.msra.mxu0 %v222
    %292 = vmatpush.msra.mxu0 %v221
    %293 = vmatpush.msra.mxu0 %v220
    %294 = vmatmul.f32.gmra.mxu0 %v276
    %v295 = vpop.f32.mrf.mxu0
    %v296 = vadd.f32 %v250, %v295
    %297 = vdwg.mxu0
    %v299 = vperm.slane %v228, 0
    %v301 = vadd.f32 %v296, %v299
    %v302 = vtanh.pop %v301
    %303 = vst.msk [vmem:[#allocation3] sm:$0xff] %vm207, %v302
    %v305 = vsel %vm207, %v302, 0
    %307 = vmatpush.msra.mxu0 0.0
    %308 = vmatpush.msra.mxu0 0.0
    %309 = vmatpush.msra.mxu0 0.0
    %310 = vmatpush.msra.mxu0 0.0
    %311 = vmatpush.msra.mxu0 0.0
    %312 = vmatpush.msra.mxu0 0.0
    %313 = vmatpush.msra.mxu0 0.0
    %314 = vmatpush.msra.mxu0 0.0
    %315 = vmatpush.msra.mxu0 0.0
    %316 = vmatpush.msra.mxu0 0.0
    %317 = vmatpush.msra.mxu0 0.0
    %318 = vmatpush.msra.mxu0 0.0
    %319 = vmatpush.msra.mxu0 %v227
    %320 = vmatpush.msra.mxu0 %v226
    %321 = vmatpush.msra.mxu0 %v225
    %322 = vmatpush.msra.mxu0 %v224
    %323 = vmatmul.f32.gmra.mxu0 %v305
    %v324 = vpop.f32.mrf.mxu0
    %v325 = vadd.f32 0.0, %v324
    %326 = vdwg.mxu0
    %v327 = vld [vmem:[#allocation2 + $0x8] sm:$0xff]
    %328 = vmatpush.msra.mxu0 0.0
    %329 = vmatpush.msra.mxu0 0.0
    %330 = vmatpush.msra.mxu0 0.0
    %331 = vmatpush.msra.mxu0 0.0
    %332 = vmatpush.msra.mxu0 0.0
    %333 = vmatpush.msra.mxu0 0.0
    %334 = vmatpush.msra.mxu0 0.0
    %335 = vmatpush.msra.mxu0 0.0
    %336 = vmatpush.msra.mxu0 0.0
    %337 = vmatpush.msra.mxu0 0.0
    %338 = vmatpush.msra.mxu0 0.0
    %339 = vmatpush.msra.mxu0 0.0
    %340 = vmatpush.msra.mxu0 %v219
    %341 = vmatpush.msra.mxu0 %v218
    %342 = vmatpush.msra.mxu0 %v217
    %343 = vmatpush.msra.mxu0 %v216
    %344 = vmatmul.f32.gmra.mxu0 %v276
    %v345 = vpop.f32.mrf.mxu0
    %v346 = vadd.f32 0.0, %v345
    %347 = vdwg.mxu0
    %v348 = vadd.f32 %v327, %v346
    %v349 = vtanh.pop %v348
    %v351 = vsel %vm207, %v349, 0
    %353 = vmatpush.msra.mxu0 0.0
    %354 = vmatpush.msra.mxu0 0.0
    %355 = vmatpush.msra.mxu0 0.0
    %356 = vmatpush.msra.mxu0 0.0
    %357 = vmatpush.msra.mxu0 0.0
    %358 = vmatpush.msra.mxu0 0.0
    %359 = vmatpush.msra.mxu0 0.0
    %360 = vmatpush.msra.mxu0 0.0
    %361 = vmatpush.msra.mxu0 0.0
    %362 = vmatpush.msra.mxu0 0.0
    %363 = vmatpush.msra.mxu0 0.0
    %364 = vmatpush.msra.mxu0 0.0
    %365 = vmatpush.msra.mxu0 %v223
    %366 = vmatpush.msra.mxu0 %v222
    %367 = vmatpush.msra.mxu0 %v221
    %368 = vmatpush.msra.mxu0 %v220
    %369 = vmatmul.f32.gmra.mxu0 %v351
    %v370 = vpop.f32.mrf.mxu0
    %v371 = vadd.f32 %v325, %v370
    %372 = vdwg.mxu0
    %v373 = vadd.f32 %v371, %v299
    %v374 = vtanh.pop %v373
    %s375 = scalar_lea.vmem [#allocation3], 8
    %376 = vst.msk [vmem:[%s375] sm:$0xff] %vm207, %v374
    %v378 = vsel %vm207, %v374, 0
    %380 = vmatpush.msra.mxu0 0.0
    %381 = vmatpush.msra.mxu0 0.0
    %382 = vmatpush.msra.mxu0 0.0
    %383 = vmatpush.msra.mxu0 0.0
    %384 = vmatpush.msra.mxu0 0.0
    %385 = vmatpush.msra.mxu0 0.0
    %386 = vmatpush.msra.mxu0 0.0
    %387 = vmatpush.msra.mxu0 0.0
    %388 = vmatpush.msra.mxu0 0.0
    %389 = vmatpush.msra.mxu0 0.0
    %390 = vmatpush.msra.mxu0 0.0
    %391 = vmatpush.msra.mxu0 0.0
    %392 = vmatpush.msra.mxu0 %v227
    %393 = vmatpush.msra.mxu0 %v226
    %394 = vmatpush.msra.mxu0 %v225
    %395 = vmatpush.msra.mxu0 %v224
    %396 = vmatmul.f32.gmra.mxu0 %v378
    %v397 = vpop.f32.mrf.mxu0
    %v398 = vadd.f32 0.0, %v397
    %399 = vdwg.mxu0
    %v400 = vld [vmem:[#allocation2 + $0x10] sm:$0xff]
    %401 = vmatpush.msra.mxu0 0.0
    %402 = vmatpush.msra.mxu0 0.0
    %403 = vmatpush.msra.mxu0 0.0
    %404 = vmatpush.msra.mxu0 0.0
    %405 = vmatpush.msra.mxu0 0.0
    %406 = vmatpush.msra.mxu0 0.0
    %407 = vmatpush.msra.mxu0 0.0
    %408 = vmatpush.msra.mxu0 0.0
    %409 = vmatpush.msra.mxu0 0.0
    %410 = vmatpush.msra.mxu0 0.0
    %411 = vmatpush.msra.mxu0 0.0
    %412 = vmatpush.msra.mxu0 0.0
    %413 = vmatpush.msra.mxu0 %v219
    %414 = vmatpush.msra.mxu0 %v218
    %415 = vmatpush.msra.mxu0 %v217
    %416 = vmatpush.msra.mxu0 %v216
    %417 = vmatmul.f32.gmra.mxu0 %v351
    %v418 = vpop.f32.mrf.mxu0
    %v419 = vadd.f32 0.0, %v418
    %420 = vdwg.mxu0
    %v421 = vadd.f32 %v400, %v419
    %v422 = vtanh.pop %v421
    %v424 = vsel %vm207, %v422, 0
    %426 = vmatpush.msra.mxu0 0.0
    %427 = vmatpush.msra.mxu0 0.0
    %428 = vmatpush.msra.mxu0 0.0
    %429 = vmatpush.msra.mxu0 0.0
    %430 = vmatpush.msra.mxu0 0.0
    %431 = vmatpush.msra.mxu0 0.0
    %432 = vmatpush.msra.mxu0 0.0
    %433 = vmatpush.msra.mxu0 0.0
    %434 = vmatpush.msra.mxu0 0.0
    %435 = vmatpush.msra.mxu0 0.0
    %436 = vmatpush.msra.mxu0 0.0
    %437 = vmatpush.msra.mxu0 0.0
    %438 = vmatpush.msra.mxu0 %v223
    %439 = vmatpush.msra.mxu0 %v222
    %440 = vmatpush.msra.mxu0 %v221
    %441 = vmatpush.msra.mxu0 %v220
    %442 = vmatmul.f32.gmra.mxu0 %v424
    %v443 = vpop.f32.mrf.mxu0
    %v444 = vadd.f32 %v398, %v443
    %445 = vdwg.mxu0
    %v446 = vadd.f32 %v444, %v299
    %v447 = vtanh.pop %v446
    %s448 = scalar_lea.vmem [#allocation3], 16
    %449 = vst.msk [vmem:[%s448] sm:$0xff] %vm207, %v447
    %v451 = vsel %vm207, %v447, 0
    %453 = vmatpush.msra.mxu0 0.0
    %454 = vmatpush.msra.mxu0 0.0
    %455 = vmatpush.msra.mxu0 0.0
    %456 = vmatpush.msra.mxu0 0.0
    %457 = vmatpush.msra.mxu0 0.0
    %458 = vmatpush.msra.mxu0 0.0
    %459 = vmatpush.msra.mxu0 0.0
    %460 = vmatpush.msra.mxu0 0.0
    %461 = vmatpush.msra.mxu0 0.0
    %462 = vmatpush.msra.mxu0 0.0
    %463 = vmatpush.msra.mxu0 0.0
    %464 = vmatpush.msra.mxu0 0.0
    %465 = vmatpush.msra.mxu0 %v227
    %466 = vmatpush.msra.mxu0 %v226
    %467 = vmatpush.msra.mxu0 %v225
    %468 = vmatpush.msra.mxu0 %v224
    %469 = vmatmul.f32.gmra.mxu0 %v451
    %v470 = vpop.f32.mrf.mxu0
    %v471 = vadd.f32 0.0, %v470
    %472 = vdwg.mxu0
    %v473 = vld [vmem:[#allocation2 + $0x18] sm:$0xff]
    %474 = vmatpush.msra.mxu0 0.0
    %475 = vmatpush.msra.mxu0 0.0
    %476 = vmatpush.msra.mxu0 0.0
    %477 = vmatpush.msra.mxu0 0.0
    %478 = vmatpush.msra.mxu0 0.0
    %479 = vmatpush.msra.mxu0 0.0
    %480 = vmatpush.msra.mxu0 0.0
    %481 = vmatpush.msra.mxu0 0.0
    %482 = vmatpush.msra.mxu0 0.0
    %483 = vmatpush.msra.mxu0 0.0
    %484 = vmatpush.msra.mxu0 0.0
    %485 = vmatpush.msra.mxu0 0.0
    %486 = vmatpush.msra.mxu0 %v219
    %487 = vmatpush.msra.mxu0 %v218
    %488 = vmatpush.msra.mxu0 %v217
    %489 = vmatpush.msra.mxu0 %v216
    %490 = vmatmul.f32.gmra.mxu0 %v424
    %v491 = vpop.f32.mrf.mxu0
    %v492 = vadd.f32 0.0, %v491
    %493 = vdwg.mxu0
    %v494 = vadd.f32 %v473, %v492
    %v495 = vtanh.pop %v494
    %v497 = vsel %vm207, %v495, 0
    %499 = vmatpush.msra.mxu0 0.0
    %500 = vmatpush.msra.mxu0 0.0
    %501 = vmatpush.msra.mxu0 0.0
    %502 = vmatpush.msra.mxu0 0.0
    %503 = vmatpush.msra.mxu0 0.0
    %504 = vmatpush.msra.mxu0 0.0
    %505 = vmatpush.msra.mxu0 0.0
    %506 = vmatpush.msra.mxu0 0.0
    %507 = vmatpush.msra.mxu0 0.0
    %508 = vmatpush.msra.mxu0 0.0
    %509 = vmatpush.msra.mxu0 0.0
    %510 = vmatpush.msra.mxu0 0.0
    %511 = vmatpush.msra.mxu0 %v223
    %512 = vmatpush.msra.mxu0 %v222
    %513 = vmatpush.msra.mxu0 %v221
    %514 = vmatpush.msra.mxu0 %v220
    %515 = vmatmul.f32.gmra.mxu0 %v497
    %v516 = vpop.f32.mrf.mxu0
    %v517 = vadd.f32 %v471, %v516
    %518 = vdwg.mxu0
    %v519 = vadd.f32 %v517, %v299
    %v520 = vtanh.pop %v519
    %s521 = scalar_lea.vmem [#allocation3], 24
    %522 = vst.msk [vmem:[%s521] sm:$0xff] %vm207, %v520
    %v524 = vsel %vm207, %v520, 0
    %526 = vmatpush.msra.mxu0 0.0
    %527 = vmatpush.msra.mxu0 0.0
    %528 = vmatpush.msra.mxu0 0.0
    %529 = vmatpush.msra.mxu0 0.0
    %530 = vmatpush.msra.mxu0 0.0
    %531 = vmatpush.msra.mxu0 0.0
    %532 = vmatpush.msra.mxu0 0.0
    %533 = vmatpush.msra.mxu0 0.0
    %534 = vmatpush.msra.mxu0 0.0
    %535 = vmatpush.msra.mxu0 0.0
    %536 = vmatpush.msra.mxu0 0.0
    %537 = vmatpush.msra.mxu0 0.0
    %538 = vmatpush.msra.mxu0 %v227
    %539 = vmatpush.msra.mxu0 %v226
    %540 = vmatpush.msra.mxu0 %v225
    %541 = vmatpush.msra.mxu0 %v224
    %542 = vmatmul.f32.gmra.mxu0 %v524
    %v543 = vpop.f32.mrf.mxu0
    %v544 = vadd.f32 0.0, %v543
    %545 = vdwg.mxu0
    %v546 = vld [vmem:[#allocation2 + $0x20] sm:$0xff]
    %547 = vmatpush.msra.mxu0 0.0
    %548 = vmatpush.msra.mxu0 0.0
    %549 = vmatpush.msra.mxu0 0.0
    %550 = vmatpush.msra.mxu0 0.0
    %551 = vmatpush.msra.mxu0 0.0
    %552 = vmatpush.msra.mxu0 0.0
    %553 = vmatpush.msra.mxu0 0.0
    %554 = vmatpush.msra.mxu0 0.0
    %555 = vmatpush.msra.mxu0 0.0
    %556 = vmatpush.msra.mxu0 0.0
    %557 = vmatpush.msra.mxu0 0.0
    %558 = vmatpush.msra.mxu0 0.0
    %559 = vmatpush.msra.mxu0 %v219
    %560 = vmatpush.msra.mxu0 %v218
    %561 = vmatpush.msra.mxu0 %v217
    %562 = vmatpush.msra.mxu0 %v216
    %563 = vmatmul.f32.gmra.mxu0 %v497
    %v564 = vpop.f32.mrf.mxu0
    %v565 = vadd.f32 0.0, %v564
    %566 = vdwg.mxu0
    %v567 = vadd.f32 %v546, %v565
    %v568 = vtanh.pop %v567
    %v570 = vsel %vm207, %v568, 0
    %572 = vmatpush.msra.mxu0 0.0
    %573 = vmatpush.msra.mxu0 0.0
    %574 = vmatpush.msra.mxu0 0.0
    %575 = vmatpush.msra.mxu0 0.0
    %576 = vmatpush.msra.mxu0 0.0
    %577 = vmatpush.msra.mxu0 0.0
    %578 = vmatpush.msra.mxu0 0.0
    %579 = vmatpush.msra.mxu0 0.0
    %580 = vmatpush.msra.mxu0 0.0
    %581 = vmatpush.msra.mxu0 0.0
    %582 = vmatpush.msra.mxu0 0.0
    %583 = vmatpush.msra.mxu0 0.0
    %584 = vmatpush.msra.mxu0 %v223
    %585 = vmatpush.msra.mxu0 %v222
    %586 = vmatpush.msra.mxu0 %v221
    %587 = vmatpush.msra.mxu0 %v220
    %588 = vmatmul.f32.gmra.mxu0 %v570
    %v589 = vpop.f32.mrf.mxu0
    %v590 = vadd.f32 %v544, %v589
    %591 = vdwg.mxu0
    %v592 = vadd.f32 %v590, %v299
    %v593 = vtanh.pop %v592
    %s594 = scalar_lea.vmem [#allocation3], 32
    %595 = vst.msk [vmem:[%s594] sm:$0xff] %vm207, %v593
    %v597 = vsel %vm207, %v593, 0
    %599 = vmatpush.msra.mxu0 0.0
    %600 = vmatpush.msra.mxu0 0.0
    %601 = vmatpush.msra.mxu0 0.0
    %602 = vmatpush.msra.mxu0 0.0
    %603 = vmatpush.msra.mxu0 0.0
    %604 = vmatpush.msra.mxu0 0.0
    %605 = vmatpush.msra.mxu0 0.0
    %606 = vmatpush.msra.mxu0 0.0
    %607 = vmatpush.msra.mxu0 0.0
    %608 = vmatpush.msra.mxu0 0.0
    %609 = vmatpush.msra.mxu0 0.0
    %610 = vmatpush.msra.mxu0 0.0
    %611 = vmatpush.msra.mxu0 %v227
    %612 = vmatpush.msra.mxu0 %v226
    %613 = vmatpush.msra.mxu0 %v225
    %614 = vmatpush.msra.mxu0 %v224
    %615 = vmatmul.f32.gmra.mxu0 %v597
    %v616 = vpop.f32.mrf.mxu0
    %v617 = vadd.f32 0.0, %v616
    %618 = vdwg.mxu0
    %v619 = vld [vmem:[#allocation2 + $0x28] sm:$0xff]
    %620 = vmatpush.msra.mxu0 0.0
    %621 = vmatpush.msra.mxu0 0.0
    %622 = vmatpush.msra.mxu0 0.0
    %623 = vmatpush.msra.mxu0 0.0
    %624 = vmatpush.msra.mxu0 0.0
    %625 = vmatpush.msra.mxu0 0.0
    %626 = vmatpush.msra.mxu0 0.0
    %627 = vmatpush.msra.mxu0 0.0
    %628 = vmatpush.msra.mxu0 0.0
    %629 = vmatpush.msra.mxu0 0.0
    %630 = vmatpush.msra.mxu0 0.0
    %631 = vmatpush.msra.mxu0 0.0
    %632 = vmatpush.msra.mxu0 %v219
    %633 = vmatpush.msra.mxu0 %v218
    %634 = vmatpush.msra.mxu0 %v217
    %635 = vmatpush.msra.mxu0 %v216
    %636 = vmatmul.f32.gmra.mxu0 %v570
    %v637 = vpop.f32.mrf.mxu0
    %v638 = vadd.f32 0.0, %v637
    %639 = vdwg.mxu0
    %v640 = vadd.f32 %v619, %v638
    %v641 = vtanh.pop %v640
    %v643 = vsel %vm207, %v641, 0
    %645 = vmatpush.msra.mxu0 0.0
    %646 = vmatpush.msra.mxu0 0.0
    %647 = vmatpush.msra.mxu0 0.0
    %648 = vmatpush.msra.mxu0 0.0
    %649 = vmatpush.msra.mxu0 0.0
    %650 = vmatpush.msra.mxu0 0.0
    %651 = vmatpush.msra.mxu0 0.0
    %652 = vmatpush.msra.mxu0 0.0
    %653 = vmatpush.msra.mxu0 0.0
    %654 = vmatpush.msra.mxu0 0.0
    %655 = vmatpush.msra.mxu0 0.0
    %656 = vmatpush.msra.mxu0 0.0
    %657 = vmatpush.msra.mxu0 %v223
    %658 = vmatpush.msra.mxu0 %v222
    %659 = vmatpush.msra.mxu0 %v221
    %660 = vmatpush.msra.mxu0 %v220
    %661 = vmatmul.f32.gmra.mxu0 %v643
    %v662 = vpop.f32.mrf.mxu0
    %v663 = vadd.f32 %v617, %v662
    %664 = vdwg.mxu0
    %v665 = vadd.f32 %v663, %v299
    %v666 = vtanh.pop %v665
    %s667 = scalar_lea.vmem [#allocation3], 40
    %668 = vst.msk [vmem:[%s667] sm:$0xff] %vm207, %v666
    %v670 = vsel %vm207, %v666, 0
    %672 = vmatpush.msra.mxu0 0.0
    %673 = vmatpush.msra.mxu0 0.0
    %674 = vmatpush.msra.mxu0 0.0
    %675 = vmatpush.msra.mxu0 0.0
    %676 = vmatpush.msra.mxu0 0.0
    %677 = vmatpush.msra.mxu0 0.0
    %678 = vmatpush.msra.mxu0 0.0
    %679 = vmatpush.msra.mxu0 0.0
    %680 = vmatpush.msra.mxu0 0.0
    %681 = vmatpush.msra.mxu0 0.0
    %682 = vmatpush.msra.mxu0 0.0
    %683 = vmatpush.msra.mxu0 0.0
    %684 = vmatpush.msra.mxu0 %v227
    %685 = vmatpush.msra.mxu0 %v226
    %686 = vmatpush.msra.mxu0 %v225
    %687 = vmatpush.msra.mxu0 %v224
    %688 = vmatmul.f32.gmra.mxu0 %v670
    %v689 = vpop.f32.mrf.mxu0
    %v690 = vadd.f32 0.0, %v689
    %691 = vdwg.mxu0
    %v692 = vld [vmem:[#allocation2 + $0x30] sm:$0xff]
    %693 = vmatpush.msra.mxu0 0.0
    %694 = vmatpush.msra.mxu0 0.0
    %695 = vmatpush.msra.mxu0 0.0
    %696 = vmatpush.msra.mxu0 0.0
    %697 = vmatpush.msra.mxu0 0.0
    %698 = vmatpush.msra.mxu0 0.0
    %699 = vmatpush.msra.mxu0 0.0
    %700 = vmatpush.msra.mxu0 0.0
    %701 = vmatpush.msra.mxu0 0.0
    %702 = vmatpush.msra.mxu0 0.0
    %703 = vmatpush.msra.mxu0 0.0
    %704 = vmatpush.msra.mxu0 0.0
    %705 = vmatpush.msra.mxu0 %v219
    %706 = vmatpush.msra.mxu0 %v218
    %707 = vmatpush.msra.mxu0 %v217
    %708 = vmatpush.msra.mxu0 %v216
    %709 = vmatmul.f32.gmra.mxu0 %v643
    %v710 = vpop.f32.mrf.mxu0
    %v711 = vadd.f32 0.0, %v710
    %712 = vdwg.mxu0
    %v713 = vadd.f32 %v692, %v711
    %v714 = vtanh.pop %v713
    %v716 = vsel %vm207, %v714, 0
    %718 = vmatpush.msra.mxu0 0.0
    %719 = vmatpush.msra.mxu0 0.0
    %720 = vmatpush.msra.mxu0 0.0
    %721 = vmatpush.msra.mxu0 0.0
    %722 = vmatpush.msra.mxu0 0.0
    %723 = vmatpush.msra.mxu0 0.0
    %724 = vmatpush.msra.mxu0 0.0
    %725 = vmatpush.msra.mxu0 0.0
    %726 = vmatpush.msra.mxu0 0.0
    %727 = vmatpush.msra.mxu0 0.0
    %728 = vmatpush.msra.mxu0 0.0
    %729 = vmatpush.msra.mxu0 0.0
    %730 = vmatpush.msra.mxu0 %v223
    %731 = vmatpush.msra.mxu0 %v222
    %732 = vmatpush.msra.mxu0 %v221
    %733 = vmatpush.msra.mxu0 %v220
    %734 = vmatmul.f32.gmra.mxu0 %v716
    %v735 = vpop.f32.mrf.mxu0
    %v736 = vadd.f32 %v690, %v735
    %737 = vdwg.mxu0
    %v738 = vadd.f32 %v736, %v299
    %v739 = vtanh.pop %v738
    %s740 = scalar_lea.vmem [#allocation3], 48
    %741 = vst.msk [vmem:[%s740] sm:$0xff] %vm207, %v739
    %v743 = vsel %vm207, %v739, 0
    %745 = vmatpush.msra.mxu0 0.0
    %746 = vmatpush.msra.mxu0 0.0
    %747 = vmatpush.msra.mxu0 0.0
    %748 = vmatpush.msra.mxu0 0.0
    %749 = vmatpush.msra.mxu0 0.0
    %750 = vmatpush.msra.mxu0 0.0
    %751 = vmatpush.msra.mxu0 0.0
    %752 = vmatpush.msra.mxu0 0.0
    %753 = vmatpush.msra.mxu0 0.0
    %754 = vmatpush.msra.mxu0 0.0
    %755 = vmatpush.msra.mxu0 0.0
    %756 = vmatpush.msra.mxu0 0.0
    %757 = vmatpush.msra.mxu0 %v227
    %758 = vmatpush.msra.mxu0 %v226
    %759 = vmatpush.msra.mxu0 %v225
    %760 = vmatpush.msra.mxu0 %v224
    %761 = vmatmul.f32.gmra.mxu0 %v743
    %v762 = vpop.f32.mrf.mxu0
    %v763 = vadd.f32 0.0, %v762
    %764 = vdwg.mxu0
    %v765 = vld [vmem:[#allocation2 + $0x38] sm:$0xff]
    %766 = vmatpush.msra.mxu0 0.0
    %767 = vmatpush.msra.mxu0 0.0
    %768 = vmatpush.msra.mxu0 0.0
    %769 = vmatpush.msra.mxu0 0.0
    %770 = vmatpush.msra.mxu0 0.0
    %771 = vmatpush.msra.mxu0 0.0
    %772 = vmatpush.msra.mxu0 0.0
    %773 = vmatpush.msra.mxu0 0.0
    %774 = vmatpush.msra.mxu0 0.0
    %775 = vmatpush.msra.mxu0 0.0
    %776 = vmatpush.msra.mxu0 0.0
    %777 = vmatpush.msra.mxu0 0.0
    %778 = vmatpush.msra.mxu0 %v219
    %779 = vmatpush.msra.mxu0 %v218
    %780 = vmatpush.msra.mxu0 %v217
    %781 = vmatpush.msra.mxu0 %v216
    %782 = vmatmul.f32.gmra.mxu0 %v716
    %v783 = vpop.f32.mrf.mxu0
    %v784 = vadd.f32 0.0, %v783
    %785 = vdwg.mxu0
    %v786 = vadd.f32 %v765, %v784
    %v787 = vtanh.pop %v786
    %v789 = vsel %vm207, %v787, 0
    %791 = vmatpush.msra.mxu0 0.0
    %792 = vmatpush.msra.mxu0 0.0
    %793 = vmatpush.msra.mxu0 0.0
    %794 = vmatpush.msra.mxu0 0.0
    %795 = vmatpush.msra.mxu0 0.0
    %796 = vmatpush.msra.mxu0 0.0
    %797 = vmatpush.msra.mxu0 0.0
    %798 = vmatpush.msra.mxu0 0.0
    %799 = vmatpush.msra.mxu0 0.0
    %800 = vmatpush.msra.mxu0 0.0
    %801 = vmatpush.msra.mxu0 0.0
    %802 = vmatpush.msra.mxu0 0.0
    %803 = vmatpush.msra.mxu0 %v223
    %804 = vmatpush.msra.mxu0 %v222
    %805 = vmatpush.msra.mxu0 %v221
    %806 = vmatpush.msra.mxu0 %v220
    %807 = vmatmul.f32.gmra.mxu0 %v789
    %v808 = vpop.f32.mrf.mxu0
    %v809 = vadd.f32 %v763, %v808
    %810 = vdwg.mxu0
    %v811 = vadd.f32 %v809, %v299
    %v812 = vtanh.pop %v811
    %s813 = scalar_lea.vmem [#allocation3], 56
    %814 = vst.msk [vmem:[%s813] sm:$0xff] %vm207, %v812
    %v815 = vld [vmem:[#allocation3] sm:$0xff]
    %v816 = vld [vmem:[#allocation13] sm:$0xff]
    %v817 = vld [vmem:[#allocation13 + $0x8] sm:$0xff]
    %v818 = vld [vmem:[#allocation13 + $0x10] sm:$0xff]
    %v819 = vld [vmem:[#allocation13 + $0x18] sm:$0xff]
    %v820 = vld [vmem:[%s8] sm:$0x1]
    %v822 = vperm.slane %v820, 0
    %v825 = vsel %vm207, %v815, 0
    %827 = vmatpush.msra.mxu0 0.0
    %828 = vmatpush.msra.mxu0 0.0
    %829 = vmatpush.msra.mxu0 0.0
    %830 = vmatpush.msra.mxu0 0.0
    %831 = vmatpush.msra.mxu0 0.0
    %832 = vmatpush.msra.mxu0 0.0
    %833 = vmatpush.msra.mxu0 0.0
    %834 = vmatpush.msra.mxu0 0.0
    %835 = vmatpush.msra.mxu0 0.0
    %836 = vmatpush.msra.mxu0 0.0
    %837 = vmatpush.msra.mxu0 0.0
    %838 = vmatpush.msra.mxu0 0.0
    %839 = vmatpush.msra.mxu0 %v819
    %840 = vmatpush.msra.mxu0 %v818
    %841 = vmatpush.msra.mxu0 %v817
    %842 = vmatpush.msra.mxu0 %v816
    %843 = vmatmul.f32.gmra.mxu0 %v825
    %v844 = vpop.f32.mrf.mxu0
    %v845 = vadd.f32 %v822, %v844
    %846 = vdwg.mxu0
    %v847 = vld [vmem:[%s375] sm:$0xff]
    %s848 = scalar_lea.vmem [#allocation13], 32
    %v849 = vld [vmem:[%s848] sm:$0xff]
    %v850 = vld [vmem:[%s848 + $0x8] sm:$0xff]
    %v851 = vld [vmem:[%s848 + $0x10] sm:$0xff]
    %v852 = vld [vmem:[%s848 + $0x18] sm:$0xff]
    %v854 = vsel %vm207, %v847, 0
    %856 = vmatpush.msra.mxu0 0.0
    %857 = vmatpush.msra.mxu0 0.0
    %858 = vmatpush.msra.mxu0 0.0
    %859 = vmatpush.msra.mxu0 0.0
    %860 = vmatpush.msra.mxu0 0.0
    %861 = vmatpush.msra.mxu0 0.0
    %862 = vmatpush.msra.mxu0 0.0
    %863 = vmatpush.msra.mxu0 0.0
    %864 = vmatpush.msra.mxu0 0.0
    %865 = vmatpush.msra.mxu0 0.0
    %866 = vmatpush.msra.mxu0 0.0
    %867 = vmatpush.msra.mxu0 0.0
    %868 = vmatpush.msra.mxu0 %v852
    %869 = vmatpush.msra.mxu0 %v851
    %870 = vmatpush.msra.mxu0 %v850
    %871 = vmatpush.msra.mxu0 %v849
    %872 = vmatmul.f32.gmra.mxu0 %v854
    %v873 = vpop.f32.mrf.mxu0
    %v874 = vadd.f32 0.0, %v873
    %875 = vdwg.mxu0
    %v876 = vadd.f32 %v845, %v874
    %v877 = vld [vmem:[%s448] sm:$0xff]
    %s878 = scalar_lea.vmem [#allocation13], 64
    %v879 = vld [vmem:[%s878] sm:$0xff]
    %v880 = vld [vmem:[%s878 + $0x8] sm:$0xff]
    %v881 = vld [vmem:[%s878 + $0x10] sm:$0xff]
    %v882 = vld [vmem:[%s878 + $0x18] sm:$0xff]
    %v884 = vsel %vm207, %v877, 0
    %886 = vmatpush.msra.mxu0 0.0
    %887 = vmatpush.msra.mxu0 0.0
    %888 = vmatpush.msra.mxu0 0.0
    %889 = vmatpush.msra.mxu0 0.0
    %890 = vmatpush.msra.mxu0 0.0
    %891 = vmatpush.msra.mxu0 0.0
    %892 = vmatpush.msra.mxu0 0.0
    %893 = vmatpush.msra.mxu0 0.0
    %894 = vmatpush.msra.mxu0 0.0
    %895 = vmatpush.msra.mxu0 0.0
    %896 = vmatpush.msra.mxu0 0.0
    %897 = vmatpush.msra.mxu0 0.0
    %898 = vmatpush.msra.mxu0 %v882
    %899 = vmatpush.msra.mxu0 %v881
    %900 = vmatpush.msra.mxu0 %v880
    %901 = vmatpush.msra.mxu0 %v879
    %902 = vmatmul.f32.gmra.mxu0 %v884
    %v903 = vpop.f32.mrf.mxu0
    %v904 = vadd.f32 0.0, %v903
    %905 = vdwg.mxu0
    %v906 = vadd.f32 %v876, %v904
    %v907 = vld [vmem:[%s521] sm:$0xff]
    %s908 = scalar_lea.vmem [#allocation13], 96
    %v909 = vld [vmem:[%s908] sm:$0xff]
    %v910 = vld [vmem:[%s908 + $0x8] sm:$0xff]
    %v911 = vld [vmem:[%s908 + $0x10] sm:$0xff]
    %v912 = vld [vmem:[%s908 + $0x18] sm:$0xff]
    %v914 = vsel %vm207, %v907, 0
    %916 = vmatpush.msra.mxu0 0.0
    %917 = vmatpush.msra.mxu0 0.0
    %918 = vmatpush.msra.mxu0 0.0
    %919 = vmatpush.msra.mxu0 0.0
    %920 = vmatpush.msra.mxu0 0.0
    %921 = vmatpush.msra.mxu0 0.0
    %922 = vmatpush.msra.mxu0 0.0
    %923 = vmatpush.msra.mxu0 0.0
    %924 = vmatpush.msra.mxu0 0.0
    %925 = vmatpush.msra.mxu0 0.0
    %926 = vmatpush.msra.mxu0 0.0
    %927 = vmatpush.msra.mxu0 0.0
    %928 = vmatpush.msra.mxu0 %v912
    %929 = vmatpush.msra.mxu0 %v911
    %930 = vmatpush.msra.mxu0 %v910
    %931 = vmatpush.msra.mxu0 %v909
    %932 = vmatmul.f32.gmra.mxu0 %v914
    %v933 = vpop.f32.mrf.mxu0
    %v934 = vadd.f32 0.0, %v933
    %935 = vdwg.mxu0
    %v936 = vadd.f32 %v906, %v934
    %v937 = vld [vmem:[%s594] sm:$0xff]
    %s938 = scalar_lea.vmem [#allocation13], 128
    %v939 = vld [vmem:[%s938] sm:$0xff]
    %v940 = vld [vmem:[%s938 + $0x8] sm:$0xff]
    %v941 = vld [vmem:[%s938 + $0x10] sm:$0xff]
    %v942 = vld [vmem:[%s938 + $0x18] sm:$0xff]
    %v944 = vsel %vm207, %v937, 0
    %946 = vmatpush.msra.mxu0 0.0
    %947 = vmatpush.msra.mxu0 0.0
    %948 = vmatpush.msra.mxu0 0.0
    %949 = vmatpush.msra.mxu0 0.0
    %950 = vmatpush.msra.mxu0 0.0
    %951 = vmatpush.msra.mxu0 0.0
    %952 = vmatpush.msra.mxu0 0.0
    %953 = vmatpush.msra.mxu0 0.0
    %954 = vmatpush.msra.mxu0 0.0
    %955 = vmatpush.msra.mxu0 0.0
    %956 = vmatpush.msra.mxu0 0.0
    %957 = vmatpush.msra.mxu0 0.0
    %958 = vmatpush.msra.mxu0 %v942
    %959 = vmatpush.msra.mxu0 %v941
    %960 = vmatpush.msra.mxu0 %v940
    %961 = vmatpush.msra.mxu0 %v939
    %962 = vmatmul.f32.gmra.mxu0 %v944
    %v963 = vpop.f32.mrf.mxu0
    %v964 = vadd.f32 0.0, %v963
    %965 = vdwg.mxu0
    %v966 = vadd.f32 %v936, %v964
    %v967 = vld [vmem:[%s667] sm:$0xff]
    %s968 = scalar_lea.vmem [#allocation13], 160
    %v969 = vld [vmem:[%s968] sm:$0xff]
    %v970 = vld [vmem:[%s968 + $0x8] sm:$0xff]
    %v971 = vld [vmem:[%s968 + $0x10] sm:$0xff]
    %v972 = vld [vmem:[%s968 + $0x18] sm:$0xff]
    %v974 = vsel %vm207, %v967, 0
    %976 = vmatpush.msra.mxu0 0.0
    %977 = vmatpush.msra.mxu0 0.0
    %978 = vmatpush.msra.mxu0 0.0
    %979 = vmatpush.msra.mxu0 0.0
    %980 = vmatpush.msra.mxu0 0.0
    %981 = vmatpush.msra.mxu0 0.0
    %982 = vmatpush.msra.mxu0 0.0
    %983 = vmatpush.msra.mxu0 0.0
    %984 = vmatpush.msra.mxu0 0.0
    %985 = vmatpush.msra.mxu0 0.0
    %986 = vmatpush.msra.mxu0 0.0
    %987 = vmatpush.msra.mxu0 0.0
    %988 = vmatpush.msra.mxu0 %v972
    %989 = vmatpush.msra.mxu0 %v971
    %990 = vmatpush.msra.mxu0 %v970
    %991 = vmatpush.msra.mxu0 %v969
    %992 = vmatmul.f32.gmra.mxu0 %v974
    %v993 = vpop.f32.mrf.mxu0
    %v994 = vadd.f32 0.0, %v993
    %995 = vdwg.mxu0
    %v996 = vadd.f32 %v966, %v994
    %v997 = vld [vmem:[%s740] sm:$0xff]
    %s998 = scalar_lea.vmem [#allocation13], 192
    %v999 = vld [vmem:[%s998] sm:$0xff]
    %v1000 = vld [vmem:[%s998 + $0x8] sm:$0xff]
    %v1001 = vld [vmem:[%s998 + $0x10] sm:$0xff]
    %v1002 = vld [vmem:[%s998 + $0x18] sm:$0xff]
    %v1004 = vsel %vm207, %v997, 0
    %1006 = vmatpush.msra.mxu0 0.0
    %1007 = vmatpush.msra.mxu0 0.0
    %1008 = vmatpush.msra.mxu0 0.0
    %1009 = vmatpush.msra.mxu0 0.0
    %1010 = vmatpush.msra.mxu0 0.0
    %1011 = vmatpush.msra.mxu0 0.0
    %1012 = vmatpush.msra.mxu0 0.0
    %1013 = vmatpush.msra.mxu0 0.0
    %1014 = vmatpush.msra.mxu0 0.0
    %1015 = vmatpush.msra.mxu0 0.0
    %1016 = vmatpush.msra.mxu0 0.0
    %1017 = vmatpush.msra.mxu0 0.0
    %1018 = vmatpush.msra.mxu0 %v1002
    %1019 = vmatpush.msra.mxu0 %v1001
    %1020 = vmatpush.msra.mxu0 %v1000
    %1021 = vmatpush.msra.mxu0 %v999
    %1022 = vmatmul.f32.gmra.mxu0 %v1004
    %v1023 = vpop.f32.mrf.mxu0
    %v1024 = vadd.f32 0.0, %v1023
    %1025 = vdwg.mxu0
    %v1026 = vadd.f32 %v996, %v1024
    %v1027 = vld [vmem:[%s813] sm:$0xff]
    %s1028 = scalar_lea.vmem [#allocation13], 224
    %v1029 = vld [vmem:[%s1028] sm:$0xff]
    %v1030 = vld [vmem:[%s1028 + $0x8] sm:$0xff]
    %v1031 = vld [vmem:[%s1028 + $0x10] sm:$0xff]
    %v1032 = vld [vmem:[%s1028 + $0x18] sm:$0xff]
    %v1034 = vsel %vm207, %v1027, 0
    %1036 = vmatpush.msra.mxu0 0.0
    %1037 = vmatpush.msra.mxu0 0.0
    %1038 = vmatpush.msra.mxu0 0.0
    %1039 = vmatpush.msra.mxu0 0.0
    %1040 = vmatpush.msra.mxu0 0.0
    %1041 = vmatpush.msra.mxu0 0.0
    %1042 = vmatpush.msra.mxu0 0.0
    %1043 = vmatpush.msra.mxu0 0.0
    %1044 = vmatpush.msra.mxu0 0.0
    %1045 = vmatpush.msra.mxu0 0.0
    %1046 = vmatpush.msra.mxu0 0.0
    %1047 = vmatpush.msra.mxu0 0.0
    %1048 = vmatpush.msra.mxu0 %v1032
    %1049 = vmatpush.msra.mxu0 %v1031
    %1050 = vmatpush.msra.mxu0 %v1030
    %1051 = vmatpush.msra.mxu0 %v1029
    %1052 = vmatmul.f32.gmra.mxu0 %v1034
    %v1053 = vpop.f32.mrf.mxu0
    %v1054 = vadd.f32 0.0, %v1053
    %1055 = vdwg.mxu0
    %v1056 = vadd.f32 %v1026, %v1054
    %1057 = vst [vmem:[#allocation15] sm:$0xff] %v1056
    // Predicated region
    $region62: #{tpu_custom_call.1} parent=1 // pred_check
      _
    $region63: #{tpu_custom_call.1} parent=1 // pred_check_branch
      %1059 = sbr.rel (0) target = $region65
    $region64: #{tpu_custom_call.1} parent=1 // pred_region
      %1061 = vsyncadd [#allocation6], 0
      %s1063 = sshll.u32 [#allocation15], 4
      %s1064 = int_to_ptr.vmem [resolvable:$true] %s1063
      %s1065 = sshll.u32 %s9, 4
      %s1066 = int_to_ptr.hbm [resolvable:$true] %s1065
      %1068 = dma.vmem_to_hbm [thread:$0]  %s1064, 128, %s1066, [#allocation6]
    $region65: #{tpu_custom_call.1} parent=1 // pred_fallthru
      _
    // Predicated region
    $region66: #{tpu_custom_call.1} parent=1 // pred_check
      _
    $region67: #{tpu_custom_call.1} parent=1 // pred_check_branch
      %1070 = sbr.rel (0) target = $region69
    $region68: #{tpu_custom_call.1} parent=1 // pred_region
      %1072 = dma.done [#allocation6], 128
    $region69: #{tpu_custom_call.1} parent=1 // pred_fallthru
      _
    %1073 = vsyncpa [#allocation5], 1
    %1074 = vsyncpa [#allocation8], 1
    %1075 = vsyncpa [#allocation11], 1
    %1076 = vsyncpa [#allocation14], 1
    %1077 = vsyncpa [#allocation6], 1

</llo_original>
